<compile_context>
chip_gen: v5e
topology: v5e:2x2
jax: 0.10.0
libtpu: 0.0.40
codegen_flags: <defaults>
</compile_context>

<pallas_src>
import functools
import math

import jax
import jax.numpy as jnp
from jax.experimental import pallas as pl
from jax.experimental.pallas import tpu as pltpu


def _self_attention_kernel(x_ref, mask_ref, wqkv_ref, wo_t_ref,
                           ctx_out_ref, scores_out_ref, acc_ref, *, head_dim):
    # x_ref:      (1, 1, S, hd)   this (batch, head) slice of hidden_states
    # mask_ref:   (1, 1, 1, S)    compact additive mask (broadcast in-kernel)
    # wqkv_ref:   (hd, 3*hd)      fused, pre-transposed Q/K/V weight (shared by heads)
    # wo_t_ref:   (hd, H)         rows [h*hd:(h+1)*hd] of Wo^T for the current head
    # ctx_out:    (1, S, H)       accumulated over the head grid axis
    # scores_out: (1, 1, S, S)
    # acc_ref:    (S, H) f32      VMEM scratch accumulator for the output projection
    h = pl.program_id(1)

    @pl.when(h == 0)
    def _init():
        acc_ref[...] = jnp.zeros_like(acc_ref)

    scale = 1.0 / math.sqrt(head_dim)
    mm_dtype = wqkv_ref.dtype          # f32, or bf16 when compute_dtype was requested

    xh = x_ref[0, 0]                   # (S, hd), lane-dense head block
    # Fused Q/K/V projection: one MXU push, N = 3*hd fills the MXU better.
    qkv = jnp.dot(xh, wqkv_ref[...], preferred_element_type=jnp.float32)  # (S, 3hd)
    q = qkv[:, :head_dim]
    k = qkv[:, head_dim:2 * head_dim]
    v = qkv[:, 2 * head_dim:]

    # q @ k^T: contract last dims of both (no explicit transpose copy).
    s = jax.lax.dot_general(q, k, (((1,), (1,)), ((), ())),
                            preferred_element_type=jnp.float32)           # (S, S)
    # Compact mask row (1, S) broadcasts over the sublane (query) axis for free.
    s = s * scale + mask_ref[0, 0]
    scores_out_ref[0, 0] = s.astype(scores_out_ref.dtype)

    # NOTE: no softmax -- raw scaled (masked) scores hit V, exactly as in the module.
    ctx_h = jnp.dot(s.astype(mm_dtype), v.astype(mm_dtype),
                    preferred_element_type=jnp.float32)                   # (S, hd)
    # Output projection accumulated per head: acc += ctx_h @ Wo^T[h*hd:(h+1)*hd, :].
    acc_ref[...] += jnp.dot(ctx_h.astype(mm_dtype), wo_t_ref[...],
                            preferred_element_type=jnp.float32)           # (S, H)

    @pl.when(h == pl.num_programs(1) - 1)
    def _finalize():
        ctx_out_ref[0] = acc_ref[...].astype(ctx_out_ref.dtype)


def self_attention_forward(hidden_states, wq, wk, wv, wo, attention_mask=None, *,
                           num_heads, compute_dtype=None):
    """Pallas TPU equivalent of SelfAttention.forward -> (context, attention_scores).

    wq/wk/wv: (head_dim, head_dim) PyTorch (out, in) Linear weights (shared by heads).
    wo:       (hidden, hidden)     PyTorch (out, in) Linear weight.
    attention_mask: additive mask broadcastable to (B, 1, 1, S) (standard BERT
    padding mask), or None.
    compute_dtype: optional matmul-operand dtype (e.g. jnp.bfloat16); accumulation
    and the returned attention_scores stay float32.
    """
    B, S, H = hidden_states.shape
    if H % num_heads != 0:
        raise ValueError(f"hidden size {H} not a multiple of num heads {num_heads}")
    hd = H // num_heads

    # --- one-time wrapper-side layout prep (tiny XLA ops, not per-grid-step work) ---
    # Weights to (in, out) layout; fuse Q/K/V into one (hd, 3*hd) matrix.
    w_qkv = jnp.concatenate([wq.T, wk.T, wv.T], axis=1)          # (hd, 3*hd)
    wo_t = wo.T                                                  # (H, H), (in, out)
    # Present hidden per head so head blocks are lane-dense for any head_dim.
    x_heads = hidden_states.reshape(B, S, num_heads, hd).transpose(0, 2, 1, 3)

    if compute_dtype is not None:
        x_heads = x_heads.astype(compute_dtype)
        w_qkv = w_qkv.astype(compute_dtype)
        wo_t = wo_t.astype(compute_dtype)

    if attention_mask is None:
        # Compact zeros: B*S*4 bytes, negligible (no (B,nH,S,S) fill/DMA).
        mask = jnp.zeros((B, 1, 1, S), dtype=jnp.float32)
    else:
        # TODO(synk): only (B,1,1,S)-broadcastable padding masks take the compact
        # path; full (.., S, S) masks would need a per-head (1,1,S,S) mask BlockSpec.
        mask = jnp.broadcast_to(attention_mask, (B, 1, 1, S)).astype(jnp.float32)

    kernel = functools.partial(_self_attention_kernel, head_dim=hd)

    # Advisory cost hint for XLA's scheduler (mask broadcast term removed).
    itm = jnp.dtype(x_heads.dtype).itemsize
    flops = B * num_heads * (2 * S * hd * 3 * hd      # fused QKV projection
                             + 2 * S * S * hd         # q @ k^T
                             + 2 * S * S * hd         # scores @ v
                             + 2 * S * hd * H)        # output-projection partial
    bytes_accessed = (B * num_heads * S * hd * itm    # hidden in (per-head blocks)
                      + B * S * 4                     # compact mask in
                      + hd * 3 * hd * itm             # fused QKV weight (resident)
                      + B * H * H * itm               # Wo^T slices (cycled per batch)
                      + B * S * H * jnp.dtype(hidden_states.dtype).itemsize  # ctx out
                      + B * num_heads * S * S * 4)    # scores out

    grid_spec = pltpu.PrefetchScalarGridSpec(
        num_scalar_prefetch=0,
        grid=(B, num_heads),
        in_specs=[
            pl.BlockSpec((1, 1, S, hd), lambda b, h: (b, h, 0, 0)),   # x per (b, h)
            pl.BlockSpec((1, 1, 1, S), lambda b, h: (b, 0, 0, 0)),    # compact mask
            pl.BlockSpec((hd, 3 * hd), lambda b, h: (0, 0)),          # fused QKV (resident)
            pl.BlockSpec((hd, H), lambda b, h: (h, 0)),               # Wo^T row-slab for head h
        ],
        out_specs=[
            pl.BlockSpec((1, S, H), lambda b, h: (b, 0, 0)),          # ctx (accumulated over h)
            pl.BlockSpec((1, 1, S, S), lambda b, h: (b, h, 0, 0)),    # scores per (b, h)
        ],
        scratch_shapes=[pltpu.VMEM((S, H), jnp.float32)],
    )

    context, scores = pl.pallas_call(
        kernel,
        grid_spec=grid_spec,
        out_shape=(
            jax.ShapeDtypeStruct((B, S, H), hidden_states.dtype),
            jax.ShapeDtypeStruct((B, num_heads, S, S), jnp.float32),
        ),
        compiler_params=pltpu.CompilerParams(
            # batch axis splits across TensorCores; head axis is a reduction
            dimension_semantics=("parallel", "arbitrary")),
        cost_estimate=pl.CostEstimate(flops=flops, transcendentals=0,
                                      bytes_accessed=bytes_accessed),
    )(x_heads, mask, w_qkv, wo_t)
    return context, scores


def _self_attention_ref(x, wq, wk, wv, wo, mask, num_heads):
    """Pure-JAX reference mirroring the PyTorch forward exactly (no softmax/dropout)."""
    B, S, H = x.shape
    hd = H // num_heads
    hi = jax.lax.Precision.HIGHEST
    xh = x.reshape(B, S, num_heads, hd).transpose(0, 2, 1, 3)          # (B,nH,S,hd)
    q = jnp.einsum("bhsd,ed->bhse", xh, wq, precision=hi)              # x @ Wq.T
    k = jnp.einsum("bhsd,ed->bhse", xh, wk, precision=hi)
    v = jnp.einsum("bhsd,ed->bhse", xh, wv, precision=hi)
    scores = jnp.einsum("bhqd,bhkd->bhqk", q, k, precision=hi) / math.sqrt(hd)
    if mask is not None:
        scores = scores + mask
    ctx = jnp.einsum("bhqk,bhkd->bhqd", scores, v, precision=hi)
    ctx = ctx.transpose(0, 2, 1, 3).reshape(B, S, H)
    out = jnp.einsum("bsh,oh->bso", ctx, wo, precision=hi)             # ctx @ Wo.T
    return out, scores


if __name__ == "__main__":
    # Small config consistent with the module: batch=2, seq=128, hidden=256, heads=2
    # (head_dim=128, lane-aligned).
    B, S, H, NH = 2, 128, 256, 2
    hd = H // NH

    key = jax.random.PRNGKey(0)
    k_x, k_q, k_k, k_v, k_o, k_m = jax.random.split(key, 6)

    x = jax.random.normal(k_x, (B, S, H), dtype=jnp.float32)
    wq = jax.random.normal(k_q, (hd, hd), dtype=jnp.float32) / math.sqrt(hd)
    wk = jax.random.normal(k_k, (hd, hd), dtype=jnp.float32) / math.sqrt(hd)
    wv = jax.random.normal(k_v, (hd, hd), dtype=jnp.float32) / math.sqrt(hd)
    wo = jax.random.normal(k_o, (H, H), dtype=jnp.float32) / math.sqrt(H)
    # Additive padding mask, broadcast shape (B, 1, 1, S) as produced upstream in BERT.
    attention_mask = jax.random.normal(k_m, (B, 1, 1, S), dtype=jnp.float32) * 0.5

    ref_ctx, ref_scores = _self_attention_ref(x, wq, wk, wv, wo, attention_mask, NH)

    # --- exact-dtype (f32 operands) path ---
    ctx, scores = self_attention_forward(x, wq, wk, wv, wo,
                                         attention_mask=attention_mask,
                                         num_heads=NH)
    ctx = jax.block_until_ready(ctx)
    scores = jax.block_until_ready(scores)

    assert ctx.shape == (B, S, H) and ctx.dtype == jnp.float32
    assert scores.shape == (B, NH, S, S) and scores.dtype == jnp.float32
    # Tolerances cover MXU default-precision differences vs the HIGHEST-precision ref.
    assert jnp.allclose(scores, ref_scores, rtol=2e-2, atol=2e-2), \
        "attention_scores mismatch vs reference"
    assert jnp.allclose(ctx, ref_ctx, rtol=2e-2, atol=2e-2), \
        "context mismatch vs reference"

    # --- optional bf16-operand path (f32 accumulation); relative-norm sanity check ---
    ctx_bf, scores_bf = self_attention_forward(x, wq, wk, wv, wo,
                                               attention_mask=attention_mask,
                                               num_heads=NH,
                                               compute_dtype=jnp.bfloat16)
    ctx_bf = jax.block_until_ready(ctx_bf)
    scores_bf = jax.block_until_ready(scores_bf)

    def _rel_err(a, b):
        return float(jnp.linalg.norm(a - b) / (jnp.linalg.norm(b) + 1e-12))

    assert _rel_err(scores_bf, ref_scores) < 3e-2, "bf16 attention_scores drifted"
    assert _rel_err(ctx_bf, ref_ctx) < 3e-2, "bf16 context drifted"

    print("KERNEL_OK")
</pallas_src>

<mosaic_0001>
module attributes {stable_mosaic.version = 11 : i64} {
  func.func @_self_attention_kernel(%arg0: i32, %arg1: i32, %arg2: memref<1x1x128x128xf32, #tpu.memory_space<vmem>>, %arg3: memref<1x1x1x128xf32, #tpu.memory_space<vmem>>, %arg4: memref<128x384xf32, #tpu.memory_space<vmem>>, %arg5: memref<128x256xf32, #tpu.memory_space<vmem>>, %arg6: memref<1x128x256xf32, #tpu.memory_space<vmem>>, %arg7: memref<1x1x128x128xf32, #tpu.memory_space<vmem>>, %arg8: memref<128x256xf32, #tpu.memory_space<vmem>>) attributes {dimension_semantics = [#tpu.dimension_semantics<parallel>, #tpu.dimension_semantics<arbitrary>], iteration_bounds = array<i64: 2, 2>, scalar_prefetch = 0 : i64, scratch_operands = 1 : i64, tpu.core_type = #tpu.core_type<tc>, window_params = [{transform_indices = @transform_0, window_bounds = array<i64: 1, 1, 128, 128>}, {transform_indices = @transform_1, window_bounds = array<i64: 1, 1, 1, 128>}, {pipeline_mode = #tpu.pipeline_mode<synchronous>, transform_indices = @transform_2, window_bounds = array<i64: 128, 384>}, {transform_indices = @transform_3, window_bounds = array<i64: 128, 256>}, {transform_indices = @transform_4, window_bounds = array<i64: 1, 128, 256>}, {transform_indices = @transform_5, window_bounds = array<i64: 1, 1, 128, 128>}]} {
    %c0_i32 = arith.constant 0 : i32
    %0 = arith.cmpi eq, %arg1, %c0_i32 : i32
    %1 = arith.extui %0 : i1 to i32
    %c0_i32_0 = arith.constant 0 : i32
    %2 = arith.cmpi ne, %1, %c0_i32_0 : i32
    scf.if %2 {
      %cst_25 = arith.constant 0.000000e+00 : f32
      %29 = vector.broadcast %cst_25 : f32 to vector<128x256xf32>
      %c0_26 = arith.constant 0 : index
      %c0_27 = arith.constant 0 : index
      %30 = vector.load %arg8[%c0_26, %c0_27] : memref<128x256xf32, #tpu.memory_space<vmem>>, vector<128x256xf32>
      tpu.vector_store %arg8[%c0_26, %c0_27], %29 {strides = array<i32>} : memref<128x256xf32, #tpu.memory_space<vmem>>, vector<128x256xf32>,
    } else {
    }
    %c0 = arith.constant 0 : index
    %c0_1 = arith.constant 0 : index
    %c0_2 = arith.constant 0 : index
    %c0_3 = arith.constant 0 : index
    %3 = vector.load %arg2[%c0, %c0_1, %c0_2, %c0_3] : memref<1x1x128x128xf32, #tpu.memory_space<vmem>>, vector<1x1x128x128xf32>
    %4 = vector.shape_cast %3 : vector<1x1x128x128xf32> to vector<128x128xf32>
    %c0_4 = arith.constant 0 : index
    %c0_5 = arith.constant 0 : index
    %5 = vector.load %arg4[%c0_4, %c0_5] : memref<128x384xf32, #tpu.memory_space<vmem>>, vector<128x384xf32>
    %cst = arith.constant dense<0.000000e+00> : vector<128x384xf32>
    %6 = tpu.matmul %4, %5, %cst {dimension_numbers = #tpu.dot_dimension_numbers<[1], [0], [0], [1], [0, 0, 1, 1], [], []>} : vector<128x128xf32>, vector<128x384xf32>, vector<128x384xf32> -> vector<128x384xf32>
    %7 = vector.extract_strided_slice %6 {offsets = [0, 0], sizes = [128, 128], strides = [1, 1]} : vector<128x384xf32> to vector<128x128xf32>
    %8 = vector.extract_strided_slice %6 {offsets = [0, 128], sizes = [128, 128], strides = [1, 1]} : vector<128x384xf32> to vector<128x128xf32>
    %9 = vector.extract_strided_slice %6 {offsets = [0, 256], sizes = [128, 128], strides = [1, 1]} : vector<128x384xf32> to vector<128x128xf32>
    %cst_6 = arith.constant dense<0.000000e+00> : vector<128x128xf32>
    %10 = tpu.matmul %7, %8, %cst_6 {dimension_numbers = #tpu.dot_dimension_numbers<[1], [1], [0], [0], [0, 0, 1, 0], [], []>} : vector<128x128xf32>, vector<128x128xf32>, vector<128x128xf32> -> vector<128x128xf32>
    %cst_7 = arith.constant 0.0883883461 : f32
    %11 = vector.broadcast %cst_7 : f32 to vector<128x128xf32>
    %12 = arith.mulf %10, %11 : vector<128x128xf32>
    %c0_8 = arith.constant 0 : index
    %c0_9 = arith.constant 0 : index
    %c0_10 = arith.constant 0 : index
    %c0_11 = arith.constant 0 : index
    %13 = vector.load %arg3[%c0_8, %c0_9, %c0_10, %c0_11] : memref<1x1x1x128xf32, #tpu.memory_space<vmem>>, vector<1x1x1x128xf32>
    %14 = vector.shape_cast %13 : vector<1x1x1x128xf32> to vector<1x128xf32>
    %15 = vector.broadcast %14 : vector<1x128xf32> to vector<128x128xf32>
    %16 = arith.addf %12, %15 : vector<128x128xf32>
    %c0_12 = arith.constant 0 : index
    %c0_13 = arith.constant 0 : index
    %c0_14 = arith.constant 0 : index
    %c0_15 = arith.constant 0 : index
    %17 = vector.load %arg7[%c0_12, %c0_13, %c0_14, %c0_15] : memref<1x1x128x128xf32, #tpu.memory_space<vmem>>, vector<1x1x128x128xf32>
    %18 = vector.shape_cast %17 : vector<1x1x128x128xf32> to vector<128x128xf32>
    %19 = vector.shape_cast %16 : vector<128x128xf32> to vector<1x1x128x128xf32>
    tpu.vector_store %arg7[%c0_12, %c0_13, %c0_14, %c0_15], %19 {strides = array<i32>} : memref<1x1x128x128xf32, #tpu.memory_space<vmem>>, vector<1x1x128x128xf32>,
    %cst_16 = arith.constant dense<0.000000e+00> : vector<128x128xf32>
    %20 = tpu.matmul %16, %9, %cst_16 {dimension_numbers = #tpu.dot_dimension_numbers<[1], [0], [0], [1], [0, 0, 1, 1], [], []>} : vector<128x128xf32>, vector<128x128xf32>, vector<128x128xf32> -> vector<128x128xf32>
    %c0_17 = arith.constant 0 : index
    %c0_18 = arith.constant 0 : index
    %21 = vector.load %arg8[%c0_17, %c0_18] : memref<128x256xf32, #tpu.memory_space<vmem>>, vector<128x256xf32>
    %c0_19 = arith.constant 0 : index
    %c0_20 = arith.constant 0 : index
    %22 = vector.load %arg5[%c0_19, %c0_20] : memref<128x256xf32, #tpu.memory_space<vmem>>, vector<128x256xf32>
    %cst_21 = arith.constant dense<0.000000e+00> : vector<128x256xf32>
    %23 = tpu.matmul %20, %22, %cst_21 {dimension_numbers = #tpu.dot_dimension_numbers<[1], [0], [0], [1], [0, 0, 1, 1], [], []>} : vector<128x128xf32>, vector<128x256xf32>, vector<128x256xf32> -> vector<128x256xf32>
    %24 = arith.addf %21, %23 : vector<128x256xf32>
    %c0_22 = arith.constant 0 : index
    %c0_23 = arith.constant 0 : index
    %25 = vector.load %arg8[%c0_22, %c0_23] : memref<128x256xf32, #tpu.memory_space<vmem>>, vector<128x256xf32>
    tpu.vector_store %arg8[%c0_22, %c0_23], %24 {strides = array<i32>} : memref<128x256xf32, #tpu.memory_space<vmem>>, vector<128x256xf32>,
    %c1_i32 = arith.constant 1 : i32
    %26 = arith.cmpi eq, %arg1, %c1_i32 : i32
    %27 = arith.extui %26 : i1 to i32
    %c0_i32_24 = arith.constant 0 : i32
    %28 = arith.cmpi ne, %27, %c0_i32_24 : i32
    scf.if %28 {
      %c0_25 = arith.constant 0 : index
      %c0_26 = arith.constant 0 : index
      %29 = vector.load %arg8[%c0_25, %c0_26] : memref<128x256xf32, #tpu.memory_space<vmem>>, vector<128x256xf32>
      %c0_27 = arith.constant 0 : index
      %c0_28 = arith.constant 0 : index
      %c0_29 = arith.constant 0 : index
      %30 = vector.load %arg6[%c0_27, %c0_28, %c0_29] : memref<1x128x256xf32, #tpu.memory_space<vmem>>, vector<1x128x256xf32>
      %31 = vector.shape_cast %30 : vector<1x128x256xf32> to vector<128x256xf32>
      %32 = vector.shape_cast %29 : vector<128x256xf32> to vector<1x128x256xf32>
      tpu.vector_store %arg6[%c0_27, %c0_28, %c0_29], %32 {strides = array<i32>} : memref<1x128x256xf32, #tpu.memory_space<vmem>>, vector<1x128x256xf32>,
    } else {
    }
    return
  }
  func.func @transform_0(%arg0: i32, %arg1: i32) -> (i32, i32, i32, i32) {
    %c0_i32 = arith.constant 0 : i32
    %c0_i32_0 = arith.constant 0 : i32
    %c0_i32_1 = arith.constant 0 : i32
    return %arg0, %arg1, %c0_i32, %c0_i32_0 : i32, i32, i32, i32
  }
  func.func @transform_1(%arg0: i32, %arg1: i32) -> (i32, i32, i32, i32) {
    %c0_i32 = arith.constant 0 : i32
    %c0_i32_0 = arith.constant 0 : i32
    %c0_i32_1 = arith.constant 0 : i32
    %c0_i32_2 = arith.constant 0 : i32
    return %arg0, %c0_i32, %c0_i32_0, %c0_i32_1 : i32, i32, i32, i32
  }
  func.func @transform_2(%arg0: i32, %arg1: i32) -> (i32, i32) {
    %c0_i32 = arith.constant 0 : i32
    %c0_i32_0 = arith.constant 0 : i32
    %c0_i32_1 = arith.constant 0 : i32
    return %c0_i32, %c0_i32_0 : i32, i32
  }
  func.func @transform_3(%arg0: i32, %arg1: i32) -> (i32, i32) {
    %c0_i32 = arith.constant 0 : i32
    %c0_i32_0 = arith.constant 0 : i32
    return %arg1, %c0_i32 : i32, i32
  }
  func.func @transform_4(%arg0: i32, %arg1: i32) -> (i32, i32, i32) {
    %c0_i32 = arith.constant 0 : i32
    %c0_i32_0 = arith.constant 0 : i32
    %c0_i32_1 = arith.constant 0 : i32
    return %arg0, %c0_i32, %c0_i32_0 : i32, i32, i32
  }
  func.func @transform_5(%arg0: i32, %arg1: i32) -> (i32, i32, i32, i32) {
    %c0_i32 = arith.constant 0 : i32
    %c0_i32_0 = arith.constant 0 : i32
    %c0_i32_1 = arith.constant 0 : i32
    return %arg0, %arg1, %c0_i32, %c0_i32_0 : i32, i32, i32, i32
  }
}

</mosaic_0001>

<llo_original>
// kernel: tpu_custom_call.1
$region0: #{tpu_custom_call.1}
  #allocation0 [shape = 'u32[]', space=smem, size = 0x4, offset = 0x4, fixed_abs, tag = 'smem constant byte address 0x4 - core index']
  #allocation1 [shape = 'u32[72,128]{1,0:T(1,128)}', space=vmem, size = 0x9000, scoped, tag = 'internal scratch']
  #allocation2 [shape = 'f32[128,256]{1,0:T(8,128)}', space=vmem, size = 0x20000, scoped, tag = 'scratch operand']
  %s0 = inlined_call_operand.hbm [shape: f32[2,2,128,128], index: 0, kind: input, shape index: {}]
  %s1 = inlined_call_operand.hbm [shape: f32[2,1,1,128], index: 1, kind: input, shape index: {}]
  %s2 = inlined_call_operand.hbm [shape: f32[128,384], index: 2, kind: input, shape index: {}]
  %s3 = inlined_call_operand.hbm [shape: f32[256,256], index: 3, kind: input, shape index: {}]
  %s4 = inlined_call_operand.hbm [shape: f32[2,128,256], index: 4, kind: output, shape index: {0}]
  %s5 = inlined_call_operand.hbm [shape: f32[2,2,128,128], index: 5, kind: output, shape index: {1}]
  %6 = xla_tuple %s4, %s5
  %s7 = sld [smem:[#allocation0]]
  $region81: #{tpu_custom_call.1} parent=0
    _
  %s9 = ssub.s32 1, %s7
  %s10 = scalar_select 0, %s9, %s7
  $region1: #{tpu_custom_call.1} parent=0
    #allocation3 [shape = 'u8[131072]{0}', space=vmem, size = 0x20000, scoped, tag = 'input window, operand 0']
    #allocation4 [shape = 's32[2]{0}', space=sflag, size = 0x8, scoped, tag = 'scoped memory for tpu_custom_call.1']
    #allocation5 [shape = 's32[2]{0}', space=sflag, size = 0x8, scoped, tag = 'scoped memory for tpu_custom_call.1']
    #allocation6 [shape = 'u8[1024]{0}', space=vmem, size = 0x400, scoped, tag = 'input window, operand 1']
    #allocation7 [shape = 's32[2]{0}', space=sflag, size = 0x8, scoped, tag = 'scoped memory for tpu_custom_call.1']
    #allocation8 [shape = 'u8[196608]{0}', space=vmem, size = 0x30000, scoped, tag = 'input window, operand 2, single buffered']
    #allocation9 [shape = 'u8[262144]{0}', space=vmem, size = 0x40000, scoped, tag = 'input window, operand 3']
    #allocation10 [shape = 's32[2]{0}', space=sflag, size = 0x8, scoped, tag = 'scoped memory for tpu_custom_call.1']
    #allocation11 [shape = 'u8[262144]{0}', space=vmem, size = 0x40000, scoped, tag = 'output window, operand 0']
    #allocation12 [shape = 'u8[131072]{0}', space=vmem, size = 0x20000, scoped, tag = 'output window, operand 1']
    #allocation13 [shape = 's32[2]{0}', space=sflag, size = 0x8, scoped, tag = 'scoped memory for tpu_custom_call.1']
    %11 = vsyncpa [#allocation4], 0
    %s12 = scalar_lea.sflag [#allocation4], 1
    %13 = vsyncpa %s12, 0
    %14 = vsyncpa [#allocation7], 0
    %s15 = scalar_lea.sflag [#allocation7], 1
    %16 = vsyncpa %s15, 0
    %17 = vsyncpa [#allocation10], 0
    %s18 = scalar_lea.sflag [#allocation10], 1
    %19 = vsyncpa %s18, 0
    %20 = vsyncpa [#allocation5], 0
    %s21 = scalar_lea.sflag [#allocation5], 1
    %22 = vsyncpa %s21, 0
    %23 = vsyncpa [#allocation13], 0
    %s24 = scalar_lea.sflag [#allocation13], 1
    %25 = vsyncpa %s24, 0
    loop: start=0, step=1, limit=6
    $region2: #{tpu_custom_call.1} parent=1 // loop_pre_header
      _
    $region3: #{tpu_custom_call.1} parent=1 // loop_header
      %s27 = sphi 0, %s31
      %p28 = scmp.ge.s32.totalorder %s27, 6
      %s34 = sphi 0, %s46
      %s35 = sphi 0, %s42
      %s36 = sphi 0, %s34
      %s37 = sphi 0, %s35
      %s38 = sphi 0, %s36
      %s39 = sphi 0, %s37
      %s51 = sphi 0, %s53
      %s54 = sphi 0, %s51
      %s55 = sphi 0, %s54
      %s71 = sphi 0, %s55
      %s77 = sphi 0, %s79
      %s80 = sphi 0, %s77
      %s81 = sphi 0, %s80
      %s97 = sphi 0, %s81
      %s101 = sphi 0, %s101
      %s103 = sphi 0, %s101
      %s104 = sphi 0, %s103
      %s118 = sphi 0, %s104
      %s124 = sphi 0, %s126
      %s127 = sphi 0, %s124
      %s128 = sphi 0, %s127
      %s144 = sphi 0, %s128
      %s150 = sphi 0, %s152
      %s153 = sphi 0, %s150
      %s154 = sphi 0, %s153
      %s170 = sphi 0, %s154
      %s178 = sphi 0, %s180
      %s181 = sphi 0, %s178
      %s182 = sphi 0, %s181
      %s198 = sphi 0, %s182
    $region4: #{tpu_custom_call.1} parent=1 // loop_header_branch
      %30 = sbr.rel (%p28) target = $region8
    $region5: #{tpu_custom_call.1} parent=1 // loop_body
      %s32 = ssub.s32 %s27, 1
      %s33 = ssub.s32 %s27, 2
      %s40 = sadd.s32 1, %s35
      %p41 = scmp.ge.s32.totalorder %s40, 2
      %s42 = scalar_select %p41, 0, %s40
      %s43 = sadd.s32 1, %s34
      %s44 = scalar_select %p41, %s43, %s34
      %p45 = scmp.ge.s32.totalorder %s44, 2
      %s46 = scalar_select %p45, 0, %s44
      %s47 = ssub.s32 %s34, %s46
      %s48 = ssub.s32 %s35, %s42
      %s49 = sor.u32 %s47, %s48
      %p50 = scmp.eq.s32.totalorder %s49, 0
      %s52 = sadd.s32 %s51, 1
      %s53 = scalar_select %p50, %s51, %s52
      %p56 = pneg %p50
      %p57 = scmp.eq.s32.totalorder %s27, 3
      %p58 = por %p56, %p57
      %p59 = scmp.ne.s32.totalorder %s51, %s54
      %p60 = scmp.eq.s32.totalorder %s27, 0
      %p61 = por %p59, %p60
      %p62 = scmp.ne.s32.totalorder %s51, %s54
      %p63 = scmp.eq.s32.totalorder %s32, 3
      %p64 = por %p62, %p63
      %p65 = scmp.ne.s32.totalorder %s54, %s55
      %p66 = scmp.eq.s32.totalorder %s32, 0
      %p67 = por %p65, %p66
      %p68 = scmp.ne.s32.totalorder %s54, %s55
      %p69 = scmp.eq.s32.totalorder %s33, 3
      %p70 = por %p68, %p69
      %p72 = scmp.ne.s32.totalorder %s55, %s71
      %p73 = scmp.eq.s32.totalorder %s33, 0
      %p74 = por %p72, %p73
      %s75 = ssub.s32 %s34, %s46
      %p76 = scmp.eq.s32.totalorder %s75, 0
      %s78 = sadd.s32 %s77, 1
      %s79 = scalar_select %p76, %s77, %s78
      %p82 = pneg %p76
      %p83 = scmp.eq.s32.totalorder %s27, 3
      %p84 = por %p82, %p83
      %p85 = scmp.ne.s32.totalorder %s77, %s80
      %p86 = scmp.eq.s32.totalorder %s27, 0
      %p87 = por %p85, %p86
      %p88 = scmp.ne.s32.totalorder %s77, %s80
      %p89 = scmp.eq.s32.totalorder %s32, 3
      %p90 = por %p88, %p89
      %p91 = scmp.ne.s32.totalorder %s80, %s81
      %p92 = scmp.eq.s32.totalorder %s32, 0
      %p93 = por %p91, %p92
      %p94 = scmp.ne.s32.totalorder %s80, %s81
      %p95 = scmp.eq.s32.totalorder %s33, 3
      %p96 = por %p94, %p95
      %p98 = scmp.ne.s32.totalorder %s81, %s97
      %p99 = scmp.eq.s32.totalorder %s33, 0
      %p100 = por %p98, %p99
      %s102 = sadd.s32 %s101, 1
      %p105 = scmp.eq.s32.totalorder %s27, 3
      %p106 = scmp.ne.s32.totalorder %s101, %s103
      %p107 = scmp.eq.s32.totalorder %s27, 0
      %p108 = por %p106, %p107
      %p109 = scmp.ne.s32.totalorder %s101, %s103
      %p110 = scmp.eq.s32.totalorder %s32, 3
      %p111 = por %p109, %p110
      %p112 = scmp.ne.s32.totalorder %s103, %s104
      %p113 = scmp.eq.s32.totalorder %s32, 0
      %p114 = por %p112, %p113
      %p115 = scmp.ne.s32.totalorder %s103, %s104
      %p116 = scmp.eq.s32.totalorder %s33, 3
      %p117 = por %p115, %p116
      %p119 = scmp.ne.s32.totalorder %s104, %s118
      %p120 = scmp.eq.s32.totalorder %s33, 0
      %p121 = por %p119, %p120
      %s122 = ssub.s32 %s35, %s42
      %p123 = scmp.eq.s32.totalorder %s122, 0
      %s125 = sadd.s32 %s124, 1
      %s126 = scalar_select %p123, %s124, %s125
      %p129 = pneg %p123
      %p130 = scmp.eq.s32.totalorder %s27, 3
      %p131 = por %p129, %p130
      %p132 = scmp.ne.s32.totalorder %s124, %s127
      %p133 = scmp.eq.s32.totalorder %s27, 0
      %p134 = por %p132, %p133
      %p135 = scmp.ne.s32.totalorder %s124, %s127
      %p136 = scmp.eq.s32.totalorder %s32, 3
      %p137 = por %p135, %p136
      %p138 = scmp.ne.s32.totalorder %s127, %s128
      %p139 = scmp.eq.s32.totalorder %s32, 0
      %p140 = por %p138, %p139
      %p141 = scmp.ne.s32.totalorder %s127, %s128
      %p142 = scmp.eq.s32.totalorder %s33, 3
      %p143 = por %p141, %p142
      %p145 = scmp.ne.s32.totalorder %s128, %s144
      %p146 = scmp.eq.s32.totalorder %s33, 0
      %p147 = por %p145, %p146
      %s148 = ssub.s32 %s34, %s46
      %p149 = scmp.eq.s32.totalorder %s148, 0
      %s151 = sadd.s32 %s150, 1
      %s152 = scalar_select %p149, %s150, %s151
      %p155 = pneg %p149
      %p156 = scmp.eq.s32.totalorder %s27, 3
      %p157 = por %p155, %p156
      %p158 = scmp.ne.s32.totalorder %s150, %s153
      %p159 = scmp.eq.s32.totalorder %s27, 0
      %p160 = por %p158, %p159
      %p161 = scmp.ne.s32.totalorder %s150, %s153
      %p162 = scmp.eq.s32.totalorder %s32, 3
      %p163 = por %p161, %p162
      %p164 = scmp.ne.s32.totalorder %s153, %s154
      %p165 = scmp.eq.s32.totalorder %s32, 0
      %p166 = por %p164, %p165
      %p167 = scmp.ne.s32.totalorder %s153, %s154
      %p168 = scmp.eq.s32.totalorder %s33, 3
      %p169 = por %p167, %p168
      %p171 = scmp.ne.s32.totalorder %s154, %s170
      %p172 = scmp.eq.s32.totalorder %s33, 0
      %p173 = por %p171, %p172
      %s174 = ssub.s32 %s34, %s46
      %s175 = ssub.s32 %s35, %s42
      %s176 = sor.u32 %s174, %s175
      %p177 = scmp.eq.s32.totalorder %s176, 0
      %s179 = sadd.s32 %s178, 1
      %s180 = scalar_select %p177, %s178, %s179
      %p183 = pneg %p177
      %p184 = scmp.eq.s32.totalorder %s27, 3
      %p185 = por %p183, %p184
      %p186 = scmp.ne.s32.totalorder %s178, %s181
      %p187 = scmp.eq.s32.totalorder %s27, 0
      %p188 = por %p186, %p187
      %p189 = scmp.ne.s32.totalorder %s178, %s181
      %p190 = scmp.eq.s32.totalorder %s32, 3
      %p191 = por %p189, %p190
      %p192 = scmp.ne.s32.totalorder %s181, %s182
      %p193 = scmp.eq.s32.totalorder %s32, 0
      %p194 = por %p192, %p193
      %p195 = scmp.ne.s32.totalorder %s181, %s182
      %p196 = scmp.eq.s32.totalorder %s33, 3
      %p197 = por %p195, %p196
      %p199 = scmp.ne.s32.totalorder %s182, %s198
      %p200 = scmp.eq.s32.totalorder %s33, 0
      %p201 = por %p199, %p200
      %p202 = scmp.le.s32.totalorder 1, %s27
      %p203 = scmp.lt.s32.totalorder %s27, 5
      %p204 = pnand %p202, %p203
      %p205 = pneg %p204
      // Predicated region
      $region9: #{tpu_custom_call.1} parent=5 // pred_check
        _
      $region10: #{tpu_custom_call.1} parent=5 // pred_check_branch
        %207 = sbr.rel (%p204) target = $region12
      $region11: #{tpu_custom_call.1} parent=5 // pred_region
        %s208 = ssub.s32 %s27, 1
        // Predicated region
        $region13: #{tpu_custom_call.1} parent=11 // pred_check
          %p209 = pneg %p114
        $region14: #{tpu_custom_call.1} parent=11 // pred_check_branch
          %211 = sbr.rel (%p209) target = $region16
        $region15: #{tpu_custom_call.1} parent=11 // pred_region
          %213 = vsyncadd [#allocation7], 0
          %s214 = sshll.u32 %s2, 4
          %s215 = int_to_ptr.hbm [resolvable:$true] %s214
          %s216 = sshll.u32 [#allocation8], 4
          %s217 = int_to_ptr.vmem [resolvable:$true] %s216
          %222 = dma.hbm_to_vmem [thread:$0]  %s215, 6144, %s217, [#allocation7], 384, 384, 24
        $region16: #{tpu_custom_call.1} parent=11 // pred_fallthru
          _
      $region12: #{tpu_custom_call.1} parent=5 // pred_fallthru
        _
      %p223 = scmp.lt.s32.totalorder %s27, 4
      // Predicated region
      $region17: #{tpu_custom_call.1} parent=5 // pred_check
        %p224 = pneg %p223
      $region18: #{tpu_custom_call.1} parent=5 // pred_check_branch
        %226 = sbr.rel (%p224) target = $region20
      $region19: #{tpu_custom_call.1} parent=5 // pred_region
        // Predicated region
        $region21: #{tpu_custom_call.1} parent=19 // pred_check
          %p227 = pneg %p61
        $region22: #{tpu_custom_call.1} parent=19 // pred_check_branch
          %229 = sbr.rel (%p227) target = $region24
        $region23: #{tpu_custom_call.1} parent=19 // pred_region
          %s230 = sand.u32 %s51, 1
          %s231 = scalar_lea.sflag [#allocation4], %s230
          %s232 = sand.u32 %s51, 1
          %s233 = smul.addr %s232, 128
          %s234 = scalar_lea.vmem [#allocation3], %s233
          %236 = vsyncadd %s231, 0
          %s237 = smul.addr %s35, 16
          %s238 = smul.addr %s34, 32
          %s239 = sadd.s32 %s237, %s238
          %s240 = smul.addr %s239, 8
          %s241 = scalar_lea.hbm %s0, %s240
          %s242 = sshll.u32 %s241, 4
          %s243 = int_to_ptr.hbm [resolvable:$true] %s242
          %s244 = sshll.u32 %s234, 4
          %s245 = int_to_ptr.vmem [resolvable:$true] %s244
          %250 = dma.hbm_to_vmem [thread:$0]  %s243, 2048, %s245, %s231, 128, 128, 8
        $region24: #{tpu_custom_call.1} parent=19 // pred_fallthru
          _
        // Predicated region
        $region25: #{tpu_custom_call.1} parent=19 // pred_check
          %p251 = pneg %p87
        $region26: #{tpu_custom_call.1} parent=19 // pred_check_branch
          %253 = sbr.rel (%p251) target = $region28
        $region27: #{tpu_custom_call.1} parent=19 // pred_region
          %s254 = sand.u32 %s27, 1
          %s255 = scalar_lea.sflag [#allocation7], %s254
          %s256 = sand.u32 %s77, 1
          %s257 = scalar_lea.vmem [#allocation6], %s256
          %259 = vsyncadd %s255, 0
          %s260 = scalar_lea.hbm %s1, %s34
          %s262 = sshll.u32 %s260, 4
          %s263 = int_to_ptr.hbm [resolvable:$true] %s262
          %s264 = sshll.u32 %s257, 4
          %s265 = int_to_ptr.vmem [resolvable:$true] %s264
          %267 = dma.hbm_to_vmem [thread:$0]  %s263, 16, %s265, %s255
        $region28: #{tpu_custom_call.1} parent=19 // pred_fallthru
          _
        // Predicated region
        $region29: #{tpu_custom_call.1} parent=19 // pred_check
          %p268 = pneg %p134
        $region30: #{tpu_custom_call.1} parent=19 // pred_check_branch
          %270 = sbr.rel (%p268) target = $region32
        $region31: #{tpu_custom_call.1} parent=19 // pred_region
          %s271 = sand.u32 %s124, 1
          %s272 = scalar_lea.sflag [#allocation10], %s271
          %s273 = sand.u32 %s124, 1
          %s274 = smul.addr %s273, 256
          %s275 = scalar_lea.vmem [#allocation9], %s274
          %s276 = smul.u32 16, %s35
          %278 = vsyncadd %s272, 0
          %s279 = smul.addr %s276, 2
          %s280 = smul.addr %s279, 8
          %s281 = scalar_lea.hbm %s3, %s280
          %s282 = sshll.u32 %s281, 4
          %s283 = int_to_ptr.hbm [resolvable:$true] %s282
          %s284 = sshll.u32 %s275, 4
          %s285 = int_to_ptr.vmem [resolvable:$true] %s284
          %290 = dma.hbm_to_vmem [thread:$0]  %s283, 4096, %s285, %s272, 256, 256, 16
        $region32: #{tpu_custom_call.1} parent=19 // pred_fallthru
          _
      $region20: #{tpu_custom_call.1} parent=5 // pred_fallthru
        _
      %p291 = scmp.le.s32.totalorder 1, %s27
      %p292 = scmp.lt.s32.totalorder %s27, 5
      %p293 = pnand %p291, %p292
      %p294 = pneg %p293
      // Predicated region
      $region33: #{tpu_custom_call.1} parent=5 // pred_check
        _
      $region34: #{tpu_custom_call.1} parent=5 // pred_check_branch
        %296 = sbr.rel (%p293) target = $region36
      $region35: #{tpu_custom_call.1} parent=5 // pred_region
        %s297 = ssub.s32 %s27, 1
        %s298 = sand.u32 %s54, 1
        %s299 = scalar_lea.sflag [#allocation4], %s298
        %s300 = sand.u32 %s54, 1
        %s301 = smul.addr %s300, 128
        %s302 = scalar_lea.vmem [#allocation3], %s301
        // Predicated region
        $region37: #{tpu_custom_call.1} parent=35 // pred_check
          %p303 = pneg %p67
        $region38: #{tpu_custom_call.1} parent=35 // pred_check_branch
          %305 = sbr.rel (%p303) target = $region40
        $region39: #{tpu_custom_call.1} parent=35 // pred_region
          %307 = dma.done %s299, 2048
        $region40: #{tpu_custom_call.1} parent=35 // pred_fallthru
          _
        %s308 = sand.u32 %s32, 1
        %s309 = scalar_lea.sflag [#allocation7], %s308
        %s310 = sand.u32 %s80, 1
        %s311 = scalar_lea.vmem [#allocation6], %s310
        // Predicated region
        $region41: #{tpu_custom_call.1} parent=35 // pred_check
          %p312 = pneg %p93
        $region42: #{tpu_custom_call.1} parent=35 // pred_check_branch
          %314 = sbr.rel (%p312) target = $region44
        $region43: #{tpu_custom_call.1} parent=35 // pred_region
          %316 = dma.done %s309, 16
        $region44: #{tpu_custom_call.1} parent=35 // pred_fallthru
          _
        // Predicated region
        $region45: #{tpu_custom_call.1} parent=35 // pred_check
          %p317 = pneg %p114
        $region46: #{tpu_custom_call.1} parent=35 // pred_check_branch
          %319 = sbr.rel (%p317) target = $region48
        $region47: #{tpu_custom_call.1} parent=35 // pred_region
          %321 = dma.done [#allocation7], 6144
        $region48: #{tpu_custom_call.1} parent=35 // pred_fallthru
          _
        %s322 = sand.u32 %s127, 1
        %s323 = scalar_lea.sflag [#allocation10], %s322
        %s324 = sand.u32 %s127, 1
        %s325 = smul.addr %s324, 256
        %s326 = scalar_lea.vmem [#allocation9], %s325
        // Predicated region
        $region49: #{tpu_custom_call.1} parent=35 // pred_check
          %p327 = pneg %p140
        $region50: #{tpu_custom_call.1} parent=35 // pred_check_branch
          %329 = sbr.rel (%p327) target = $region52
        $region51: #{tpu_custom_call.1} parent=35 // pred_region
          %331 = dma.done %s323, 4096
        $region52: #{tpu_custom_call.1} parent=35 // pred_fallthru
          _
        %s332 = sand.u32 %s54, 1
        %s333 = scalar_lea.sflag [#allocation4], %s332
        %s334 = sand.u32 %s54, 1
        %s335 = smul.addr %s334, 128
        %s336 = scalar_lea.vmem [#allocation3], %s335
        %p337 = pneg %p67
        %p338 = pneg %p64
        %s339 = sand.u32 %s32, 1
        %s340 = scalar_lea.sflag [#allocation7], %s339
        %s341 = sand.u32 %s80, 1
        %s342 = scalar_lea.vmem [#allocation6], %s341
        %p343 = pneg %p93
        %p344 = pneg %p90
        %p345 = pneg %p114
        %p346 = pneg %p111
        %s347 = sand.u32 %s127, 1
        %s348 = scalar_lea.sflag [#allocation10], %s347
        %s349 = sand.u32 %s127, 1
        %s350 = smul.addr %s349, 256
        %s351 = scalar_lea.vmem [#allocation9], %s350
        %p352 = pneg %p140
        %p353 = pneg %p137
        %p354 = pneg %p166
        %p355 = pneg %p163
        %s356 = sand.u32 %s153, 1
        %s357 = scalar_lea.sflag [#allocation5], %s356
        %s358 = sand.u32 %s153, 1
        %s359 = smul.addr %s358, 256
        %s360 = scalar_lea.vmem [#allocation11], %s359
        %p361 = pneg %p194
        %p362 = pneg %p191
        %s363 = sand.u32 %s181, 1
        %s364 = scalar_lea.sflag [#allocation13], %s363
        %s365 = sand.u32 %s181, 1
        %s366 = smul.addr %s365, 128
        %s367 = scalar_lea.vmem [#allocation12], %s366
        %s368 = smul.u32 16, %s37
        %p369 = scmp.eq.s32.totalorder %s37, 0
        // Predicated region
        $region53: #{tpu_custom_call.1} parent=35 // pred_check
          %p370 = pneg %p369
        $region54: #{tpu_custom_call.1} parent=35 // pred_check_branch
          %372 = sbr.rel (%p370) target = $region56
        $region55: #{tpu_custom_call.1} parent=35 // pred_region
          %373 = vst [vmem:[#allocation2] sm:$0xff] 0.0
          %374 = vst [vmem:[#allocation2 + $0x8] sm:$0xff] 0.0
          %375 = vst [vmem:[#allocation2 + $0x10] sm:$0xff] 0.0
          %376 = vst [vmem:[#allocation2 + $0x18] sm:$0xff] 0.0
          %377 = vst [vmem:[#allocation2 + $0x20] sm:$0xff] 0.0
          %378 = vst [vmem:[#allocation2 + $0x28] sm:$0xff] 0.0
          %379 = vst [vmem:[#allocation2 + $0x30] sm:$0xff] 0.0
          %380 = vst [vmem:[#allocation2 + $0x38] sm:$0xff] 0.0
          %381 = vst [vmem:[#allocation2 + $0x40] sm:$0xff] 0.0
          %382 = vst [vmem:[#allocation2 + $0x48] sm:$0xff] 0.0
          %383 = vst [vmem:[#allocation2 + $0x50] sm:$0xff] 0.0
          %384 = vst [vmem:[#allocation2 + $0x58] sm:$0xff] 0.0
          %385 = vst [vmem:[#allocation2 + $0x60] sm:$0xff] 0.0
          %386 = vst [vmem:[#allocation2 + $0x68] sm:$0xff] 0.0
          %387 = vst [vmem:[#allocation2 + $0x70] sm:$0xff] 0.0
          %388 = vst [vmem:[#allocation2 + $0x78] sm:$0xff] 0.0
          %389 = vst [vmem:[#allocation2 + $0x80] sm:$0xff] 0.0
          %390 = vst [vmem:[#allocation2 + $0x88] sm:$0xff] 0.0
          %391 = vst [vmem:[#allocation2 + $0x90] sm:$0xff] 0.0
          %392 = vst [vmem:[#allocation2 + $0x98] sm:$0xff] 0.0
          %393 = vst [vmem:[#allocation2 + $0xa0] sm:$0xff] 0.0
          %394 = vst [vmem:[#allocation2 + $0xa8] sm:$0xff] 0.0
          %395 = vst [vmem:[#allocation2 + $0xb0] sm:$0xff] 0.0
          %396 = vst [vmem:[#allocation2 + $0xb8] sm:$0xff] 0.0
          %397 = vst [vmem:[#allocation2 + $0xc0] sm:$0xff] 0.0
          %398 = vst [vmem:[#allocation2 + $0xc8] sm:$0xff] 0.0
          %399 = vst [vmem:[#allocation2 + $0xd0] sm:$0xff] 0.0
          %400 = vst [vmem:[#allocation2 + $0xd8] sm:$0xff] 0.0
          %401 = vst [vmem:[#allocation2 + $0xe0] sm:$0xff] 0.0
          %402 = vst [vmem:[#allocation2 + $0xe8] sm:$0xff] 0.0
          %403 = vst [vmem:[#allocation2 + $0xf0] sm:$0xff] 0.0
          %404 = vst [vmem:[#allocation2 + $0xf8] sm:$0xff] 0.0
        $region56: #{tpu_custom_call.1} parent=35 // pred_fallthru
          _
        %v405 = vld [vmem:[%s302] sm:$0xff]
        %v406 = vld [vmem:[%s302 + $0x8] sm:$0xff]
        %v407 = vld [vmem:[%s302 + $0x10] sm:$0xff]
        %v408 = vld [vmem:[%s302 + $0x18] sm:$0xff]
        %v409 = vld [vmem:[%s302 + $0x20] sm:$0xff]
        %v410 = vld [vmem:[%s302 + $0x28] sm:$0xff]
        %v411 = vld [vmem:[%s302 + $0x30] sm:$0xff]
        %v412 = vld [vmem:[%s302 + $0x38] sm:$0xff]
        %v413 = vld [vmem:[%s302 + $0x40] sm:$0xff]
        %v414 = vld [vmem:[%s302 + $0x48] sm:$0xff]
        %v415 = vld [vmem:[%s302 + $0x50] sm:$0xff]
        %v416 = vld [vmem:[%s302 + $0x58] sm:$0xff]
        %v417 = vld [vmem:[%s302 + $0x60] sm:$0xff]
        %v418 = vld [vmem:[%s302 + $0x68] sm:$0xff]
        %v419 = vld [vmem:[%s302 + $0x70] sm:$0xff]
        %v420 = vld [vmem:[%s302 + $0x78] sm:$0xff]
        %v421 = vld [vmem:[#allocation8] sm:$0xff]
        %v422 = vld [vmem:[#allocation8 + $0x8] sm:$0xff]
        %v423 = vld [vmem:[#allocation8 + $0x10] sm:$0xff]
        %v424 = vld [vmem:[#allocation8 + $0x18] sm:$0xff]
        %v425 = vld [vmem:[#allocation8 + $0x20] sm:$0xff]
        %v426 = vld [vmem:[#allocation8 + $0x28] sm:$0xff]
        %v427 = vld [vmem:[#allocation8 + $0x30] sm:$0xff]
        %v428 = vld [vmem:[#allocation8 + $0x38] sm:$0xff]
        %v429 = vld [vmem:[#allocation8 + $0x40] sm:$0xff]
        %v430 = vld [vmem:[#allocation8 + $0x48] sm:$0xff]
        %v431 = vld [vmem:[#allocation8 + $0x50] sm:$0xff]
        %v432 = vld [vmem:[#allocation8 + $0x58] sm:$0xff]
        %v433 = vld [vmem:[#allocation8 + $0x60] sm:$0xff]
        %v434 = vld [vmem:[#allocation8 + $0x68] sm:$0xff]
        %v435 = vld [vmem:[#allocation8 + $0x70] sm:$0xff]
        %v436 = vld [vmem:[#allocation8 + $0x78] sm:$0xff]
        %v437 = vld [vmem:[#allocation8 + $0x80] sm:$0xff]
        %v438 = vld [vmem:[#allocation8 + $0x88] sm:$0xff]
        %v439 = vld [vmem:[#allocation8 + $0x90] sm:$0xff]
        %v440 = vld [vmem:[#allocation8 + $0x98] sm:$0xff]
        %v441 = vld [vmem:[#allocation8 + $0xa0] sm:$0xff]
        %v442 = vld [vmem:[#allocation8 + $0xa8] sm:$0xff]
        %v443 = vld [vmem:[#allocation8 + $0xb0] sm:$0xff]
        %v444 = vld [vmem:[#allocation8 + $0xb8] sm:$0xff]
        %v445 = vld [vmem:[#allocation8 + $0xc0] sm:$0xff]
        %v446 = vld [vmem:[#allocation8 + $0xc8] sm:$0xff]
        %v447 = vld [vmem:[#allocation8 + $0xd0] sm:$0xff]
        %v448 = vld [vmem:[#allocation8 + $0xd8] sm:$0xff]
        %v449 = vld [vmem:[#allocation8 + $0xe0] sm:$0xff]
        %v450 = vld [vmem:[#allocation8 + $0xe8] sm:$0xff]
        %v451 = vld [vmem:[#allocation8 + $0xf0] sm:$0xff]
        %v452 = vld [vmem:[#allocation8 + $0xf8] sm:$0xff]
        %v453 = vld [vmem:[#allocation8 + $0x100] sm:$0xff]
        %v454 = vld [vmem:[#allocation8 + $0x108] sm:$0xff]
        %v455 = vld [vmem:[#allocation8 + $0x110] sm:$0xff]
        %v456 = vld [vmem:[#allocation8 + $0x118] sm:$0xff]
        %v457 = vld [vmem:[#allocation8 + $0x120] sm:$0xff]
        %v458 = vld [vmem:[#allocation8 + $0x128] sm:$0xff]
        %v459 = vld [vmem:[#allocation8 + $0x130] sm:$0xff]
        %v460 = vld [vmem:[#allocation8 + $0x138] sm:$0xff]
        %v461 = vld [vmem:[#allocation8 + $0x140] sm:$0xff]
        %v462 = vld [vmem:[#allocation8 + $0x148] sm:$0xff]
        %v463 = vld [vmem:[#allocation8 + $0x150] sm:$0xff]
        %v464 = vld [vmem:[#allocation8 + $0x158] sm:$0xff]
        %v465 = vld [vmem:[#allocation8 + $0x160] sm:$0xff]
        %v466 = vld [vmem:[#allocation8 + $0x168] sm:$0xff]
        %v467 = vld [vmem:[#allocation8 + $0x170] sm:$0xff]
        %v468 = vld [vmem:[#allocation8 + $0x178] sm:$0xff]
        %469 = vmatpush.msra.mxu0 %v466
        %470 = vmatpush.msra.mxu0 %v463
        %471 = vmatpush.msra.mxu0 %v460
        %472 = vmatpush.msra.mxu0 %v457
        %473 = vmatpush.msra.mxu0 %v454
        %474 = vmatpush.msra.mxu0 %v451
        %475 = vmatpush.msra.mxu0 %v448
        %476 = vmatpush.msra.mxu0 %v445
        %477 = vmatpush.msra.mxu0 %v442
        %478 = vmatpush.msra.mxu0 %v439
        %479 = vmatpush.msra.mxu0 %v436
        %480 = vmatpush.msra.mxu0 %v433
        %481 = vmatpush.msra.mxu0 %v430
        %482 = vmatpush.msra.mxu0 %v427
        %483 = vmatpush.msra.mxu0 %v424
        %484 = vmatpush.msra.mxu0 %v421
        %485 = vmatmul.f32.gmra.mxu0 %v405
        %v486 = vpop.f32.mrf.mxu0
        %v487 = vadd.f32 0.0, %v486
        %488 = vmatmul.f32.gmra.mxu0 %v406
        %v489 = vpop.f32.mrf.mxu0
        %v490 = vadd.f32 0.0, %v489
        %491 = vmatmul.f32.gmra.mxu0 %v407
        %v492 = vpop.f32.mrf.mxu0
        %v493 = vadd.f32 0.0, %v492
        %494 = vmatmul.f32.gmra.mxu0 %v408
        %v495 = vpop.f32.mrf.mxu0
        %v496 = vadd.f32 0.0, %v495
        %497 = vmatmul.f32.gmra.mxu0 %v409
        %v498 = vpop.f32.mrf.mxu0
        %v499 = vadd.f32 0.0, %v498
        %500 = vmatmul.f32.gmra.mxu0 %v410
        %v501 = vpop.f32.mrf.mxu0
        %v502 = vadd.f32 0.0, %v501
        %503 = vmatmul.f32.gmra.mxu0 %v411
        %v504 = vpop.f32.mrf.mxu0
        %v505 = vadd.f32 0.0, %v504
        %506 = vmatmul.f32.gmra.mxu0 %v412
        %v507 = vpop.f32.mrf.mxu0
        %v508 = vadd.f32 0.0, %v507
        %509 = vmatmul.f32.gmra.mxu0 %v413
        %v510 = vpop.f32.mrf.mxu0
        %v511 = vadd.f32 0.0, %v510
        %512 = vmatmul.f32.gmra.mxu0 %v414
        %v513 = vpop.f32.mrf.mxu0
        %v514 = vadd.f32 0.0, %v513
        %515 = vmatmul.f32.gmra.mxu0 %v415
        %v516 = vpop.f32.mrf.mxu0
        %v517 = vadd.f32 0.0, %v516
        %518 = vmatmul.f32.gmra.mxu0 %v416
        %v519 = vpop.f32.mrf.mxu0
        %v520 = vadd.f32 0.0, %v519
        %521 = vmatmul.f32.gmra.mxu0 %v417
        %v522 = vpop.f32.mrf.mxu0
        %v523 = vadd.f32 0.0, %v522
        %524 = vmatmul.f32.gmra.mxu0 %v418
        %v525 = vpop.f32.mrf.mxu0
        %v526 = vadd.f32 0.0, %v525
        %527 = vmatmul.f32.gmra.mxu0 %v419
        %v528 = vpop.f32.mrf.mxu0
        %v529 = vadd.f32 0.0, %v528
        %530 = vmatmul.f32.gmra.mxu0 %v420
        %v531 = vpop.f32.mrf.mxu0
        %v532 = vadd.f32 0.0, %v531
        %533 = vdwg.mxu0
        %534 = vmatpush.msra.mxu0 %v467
        %535 = vmatpush.msra.mxu0 %v464
        %536 = vmatpush.msra.mxu0 %v461
        %537 = vmatpush.msra.mxu0 %v458
        %538 = vmatpush.msra.mxu0 %v455
        %539 = vmatpush.msra.mxu0 %v452
        %540 = vmatpush.msra.mxu0 %v449
        %541 = vmatpush.msra.mxu0 %v446
        %542 = vmatpush.msra.mxu0 %v443
        %543 = vmatpush.msra.mxu0 %v440
        %544 = vmatpush.msra.mxu0 %v437
        %545 = vmatpush.msra.mxu0 %v434
        %546 = vmatpush.msra.mxu0 %v431
        %547 = vmatpush.msra.mxu0 %v428
        %548 = vmatpush.msra.mxu0 %v425
        %549 = vmatpush.msra.mxu0 %v422
        %550 = vmatmul.f32.gmra.mxu0 %v405
        %v551 = vpop.f32.mrf.mxu0
        %v552 = vadd.f32 0.0, %v551
        %553 = vmatmul.f32.gmra.mxu0 %v406
        %v554 = vpop.f32.mrf.mxu0
        %v555 = vadd.f32 0.0, %v554
        %556 = vmatmul.f32.gmra.mxu0 %v407
        %v557 = vpop.f32.mrf.mxu0
        %v558 = vadd.f32 0.0, %v557
        %559 = vmatmul.f32.gmra.mxu0 %v408
        %v560 = vpop.f32.mrf.mxu0
        %v561 = vadd.f32 0.0, %v560
        %562 = vmatmul.f32.gmra.mxu0 %v409
        %v563 = vpop.f32.mrf.mxu0
        %v564 = vadd.f32 0.0, %v563
        %565 = vmatmul.f32.gmra.mxu0 %v410
        %v566 = vpop.f32.mrf.mxu0
        %v567 = vadd.f32 0.0, %v566
        %568 = vmatmul.f32.gmra.mxu0 %v411
        %v569 = vpop.f32.mrf.mxu0
        %v570 = vadd.f32 0.0, %v569
        %571 = vmatmul.f32.gmra.mxu0 %v412
        %v572 = vpop.f32.mrf.mxu0
        %v573 = vadd.f32 0.0, %v572
        %574 = vmatmul.f32.gmra.mxu0 %v413
        %v575 = vpop.f32.mrf.mxu0
        %v576 = vadd.f32 0.0, %v575
        %577 = vmatmul.f32.gmra.mxu0 %v414
        %v578 = vpop.f32.mrf.mxu0
        %v579 = vadd.f32 0.0, %v578
        %580 = vmatmul.f32.gmra.mxu0 %v415
        %v581 = vpop.f32.mrf.mxu0
        %v582 = vadd.f32 0.0, %v581
        %583 = vmatmul.f32.gmra.mxu0 %v416
        %v584 = vpop.f32.mrf.mxu0
        %v585 = vadd.f32 0.0, %v584
        %586 = vmatmul.f32.gmra.mxu0 %v417
        %v587 = vpop.f32.mrf.mxu0
        %v588 = vadd.f32 0.0, %v587
        %589 = vmatmul.f32.gmra.mxu0 %v418
        %v590 = vpop.f32.mrf.mxu0
        %v591 = vadd.f32 0.0, %v590
        %592 = vmatmul.f32.gmra.mxu0 %v419
        %v593 = vpop.f32.mrf.mxu0
        %v594 = vadd.f32 0.0, %v593
        %595 = vmatmul.f32.gmra.mxu0 %v420
        %v596 = vpop.f32.mrf.mxu0
        %v597 = vadd.f32 0.0, %v596
        %598 = vdwg.mxu0
        %599 = vmatpush.msra.mxu0 %v468
        %600 = vmatpush.msra.mxu0 %v465
        %601 = vmatpush.msra.mxu0 %v462
        %602 = vmatpush.msra.mxu0 %v459
        %603 = vmatpush.msra.mxu0 %v456
        %604 = vmatpush.msra.mxu0 %v453
        %605 = vmatpush.msra.mxu0 %v450
        %606 = vmatpush.msra.mxu0 %v447
        %607 = vmatpush.msra.mxu0 %v444
        %608 = vmatpush.msra.mxu0 %v441
        %609 = vmatpush.msra.mxu0 %v438
        %610 = vmatpush.msra.mxu0 %v435
        %611 = vmatpush.msra.mxu0 %v432
        %612 = vmatpush.msra.mxu0 %v429
        %613 = vmatpush.msra.mxu0 %v426
        %614 = vmatpush.msra.mxu0 %v423
        %615 = vmatmul.f32.gmra.mxu0 %v405
        %v616 = vpop.f32.mrf.mxu0
        %v617 = vadd.f32 0.0, %v616
        %618 = vmatmul.f32.gmra.mxu0 %v406
        %v619 = vpop.f32.mrf.mxu0
        %v620 = vadd.f32 0.0, %v619
        %621 = vmatmul.f32.gmra.mxu0 %v407
        %v622 = vpop.f32.mrf.mxu0
        %v623 = vadd.f32 0.0, %v622
        %624 = vmatmul.f32.gmra.mxu0 %v408
        %v625 = vpop.f32.mrf.mxu0
        %v626 = vadd.f32 0.0, %v625
        %627 = vmatmul.f32.gmra.mxu0 %v409
        %v628 = vpop.f32.mrf.mxu0
        %v629 = vadd.f32 0.0, %v628
        %630 = vmatmul.f32.gmra.mxu0 %v410
        %v631 = vpop.f32.mrf.mxu0
        %v632 = vadd.f32 0.0, %v631
        %633 = vmatmul.f32.gmra.mxu0 %v411
        %v634 = vpop.f32.mrf.mxu0
        %v635 = vadd.f32 0.0, %v634
        %636 = vmatmul.f32.gmra.mxu0 %v412
        %v637 = vpop.f32.mrf.mxu0
        %v638 = vadd.f32 0.0, %v637
        %639 = vmatmul.f32.gmra.mxu0 %v413
        %v640 = vpop.f32.mrf.mxu0
        %v641 = vadd.f32 0.0, %v640
        %642 = vmatmul.f32.gmra.mxu0 %v414
        %v643 = vpop.f32.mrf.mxu0
        %v644 = vadd.f32 0.0, %v643
        %645 = vmatmul.f32.gmra.mxu0 %v415
        %v646 = vpop.f32.mrf.mxu0
        %v647 = vadd.f32 0.0, %v646
        %648 = vmatmul.f32.gmra.mxu0 %v416
        %v649 = vpop.f32.mrf.mxu0
        %v650 = vadd.f32 0.0, %v649
        %651 = vmatmul.f32.gmra.mxu0 %v417
        %v652 = vpop.f32.mrf.mxu0
        %v653 = vadd.f32 0.0, %v652
        %654 = vmatmul.f32.gmra.mxu0 %v418
        %v655 = vpop.f32.mrf.mxu0
        %v656 = vadd.f32 0.0, %v655
        %657 = vmatmul.f32.gmra.mxu0 %v419
        %v658 = vpop.f32.mrf.mxu0
        %v659 = vadd.f32 0.0, %v658
        %660 = vmatmul.f32.gmra.mxu0 %v420
        %v661 = vpop.f32.mrf.mxu0
        %v662 = vadd.f32 0.0, %v661
        %663 = vdwg.mxu0
        %664 = vmatpush.xpose.msra.mxu0 %v597
        %665 = vmatpush.xpose.msra.mxu0 %v594
        %666 = vmatpush.xpose.msra.mxu0 %v591
        %667 = vmatpush.xpose.msra.mxu0 %v588
        %668 = vmatpush.xpose.msra.mxu0 %v585
        %669 = vmatpush.xpose.msra.mxu0 %v582
        %670 = vmatpush.xpose.msra.mxu0 %v579
        %671 = vmatpush.xpose.msra.mxu0 %v576
        %672 = vmatpush.xpose.msra.mxu0 %v573
        %673 = vmatpush.xpose.msra.mxu0 %v570
        %674 = vmatpush.xpose.msra.mxu0 %v567
        %675 = vmatpush.xpose.msra.mxu0 %v564
        %676 = vmatpush.xpose.msra.mxu0 %v561
        %677 = vmatpush.xpose.msra.mxu0 %v558
        %678 = vmatpush.xpose.msra.mxu0 %v555
        %679 = vmatpush.xpose.msra.mxu0 %v552
        %680 = vmatmul.f32.gmra.mxu0 %v487
        %v681 = vpop.f32.mrf.mxu0
        %v682 = vadd.f32 0.0, %v681
        %683 = vmatmul.f32.gmra.mxu0 %v490
        %v684 = vpop.f32.mrf.mxu0
        %v685 = vadd.f32 0.0, %v684
        %686 = vmatmul.f32.gmra.mxu0 %v493
        %v687 = vpop.f32.mrf.mxu0
        %v688 = vadd.f32 0.0, %v687
        %689 = vmatmul.f32.gmra.mxu0 %v496
        %v690 = vpop.f32.mrf.mxu0
        %v691 = vadd.f32 0.0, %v690
        %692 = vmatmul.f32.gmra.mxu0 %v499
        %v693 = vpop.f32.mrf.mxu0
        %v694 = vadd.f32 0.0, %v693
        %695 = vmatmul.f32.gmra.mxu0 %v502
        %v696 = vpop.f32.mrf.mxu0
        %v697 = vadd.f32 0.0, %v696
        %698 = vmatmul.f32.gmra.mxu0 %v505
        %v699 = vpop.f32.mrf.mxu0
        %v700 = vadd.f32 0.0, %v699
        %701 = vmatmul.f32.gmra.mxu0 %v508
        %v702 = vpop.f32.mrf.mxu0
        %v703 = vadd.f32 0.0, %v702
        %704 = vmatmul.f32.gmra.mxu0 %v511
        %v705 = vpop.f32.mrf.mxu0
        %v706 = vadd.f32 0.0, %v705
        %707 = vmatmul.f32.gmra.mxu0 %v514
        %v708 = vpop.f32.mrf.mxu0
        %v709 = vadd.f32 0.0, %v708
        %710 = vmatmul.f32.gmra.mxu0 %v517
        %v711 = vpop.f32.mrf.mxu0
        %v712 = vadd.f32 0.0, %v711
        %713 = vmatmul.f32.gmra.mxu0 %v520
        %v714 = vpop.f32.mrf.mxu0
        %v715 = vadd.f32 0.0, %v714
        %716 = vmatmul.f32.gmra.mxu0 %v523
        %v717 = vpop.f32.mrf.mxu0
        %v718 = vadd.f32 0.0, %v717
        %719 = vmatmul.f32.gmra.mxu0 %v526
        %v720 = vpop.f32.mrf.mxu0
        %v721 = vadd.f32 0.0, %v720
        %722 = vmatmul.f32.gmra.mxu0 %v529
        %v723 = vpop.f32.mrf.mxu0
        %v724 = vadd.f32 0.0, %v723
        %725 = vmatmul.f32.gmra.mxu0 %v532
        %v726 = vpop.f32.mrf.mxu0
        %v727 = vadd.f32 0.0, %v726
        %728 = vdwg.mxu0
        %v729 = vmul.f32 %v682, 0.088388346
        %v730 = vmul.f32 %v685, 0.088388346
        %v731 = vmul.f32 %v688, 0.088388346
        %v732 = vmul.f32 %v691, 0.088388346
        %v733 = vmul.f32 %v694, 0.088388346
        %v734 = vmul.f32 %v697, 0.088388346
        %v735 = vmul.f32 %v700, 0.088388346
        %v736 = vmul.f32 %v703, 0.088388346
        %v737 = vmul.f32 %v706, 0.088388346
        %v738 = vmul.f32 %v709, 0.088388346
        %v739 = vmul.f32 %v712, 0.088388346
        %v740 = vmul.f32 %v715, 0.088388346
        %v741 = vmul.f32 %v718, 0.088388346
        %v742 = vmul.f32 %v721, 0.088388346
        %v743 = vmul.f32 %v724, 0.088388346
        %v744 = vmul.f32 %v727, 0.088388346
        %v745 = vld [vmem:[%s311] sm:$0x1]
        %v747 = vperm.slane %v745, 0
        %v749 = vadd.f32 %v729, %v747
        %v750 = vadd.f32 %v730, %v747
        %v751 = vadd.f32 %v731, %v747
        %v752 = vadd.f32 %v732, %v747
        %v753 = vadd.f32 %v733, %v747
        %v754 = vadd.f32 %v734, %v747
        %v755 = vadd.f32 %v735, %v747
        %v756 = vadd.f32 %v736, %v747
        %v757 = vadd.f32 %v737, %v747
        %v758 = vadd.f32 %v738, %v747
        %v759 = vadd.f32 %v739, %v747
        %v760 = vadd.f32 %v740, %v747
        %v761 = vadd.f32 %v741, %v747
        %v762 = vadd.f32 %v742, %v747
        %v763 = vadd.f32 %v743, %v747
        %v764 = vadd.f32 %v744, %v747
        %765 = vst [vmem:[%s367] sm:$0xff] %v749
        %766 = vst [vmem:[%s367 + $0x8] sm:$0xff] %v750
        %767 = vst [vmem:[%s367 + $0x10] sm:$0xff] %v751
        %768 = vst [vmem:[%s367 + $0x18] sm:$0xff] %v752
        %769 = vst [vmem:[%s367 + $0x20] sm:$0xff] %v753
        %770 = vst [vmem:[%s367 + $0x28] sm:$0xff] %v754
        %771 = vst [vmem:[%s367 + $0x30] sm:$0xff] %v755
        %772 = vst [vmem:[%s367 + $0x38] sm:$0xff] %v756
        %773 = vst [vmem:[%s367 + $0x40] sm:$0xff] %v757
        %774 = vst [vmem:[%s367 + $0x48] sm:$0xff] %v758
        %775 = vst [vmem:[%s367 + $0x50] sm:$0xff] %v759
        %776 = vst [vmem:[%s367 + $0x58] sm:$0xff] %v760
        %777 = vst [vmem:[%s367 + $0x60] sm:$0xff] %v761
        %778 = vst [vmem:[%s367 + $0x68] sm:$0xff] %v762
        %779 = vst [vmem:[%s367 + $0x70] sm:$0xff] %v763
        %780 = vst [vmem:[%s367 + $0x78] sm:$0xff] %v764
        %781 = vmatpush.msra.mxu0 %v662
        %782 = vmatpush.msra.mxu0 %v659
        %783 = vmatpush.msra.mxu0 %v656
        %784 = vmatpush.msra.mxu0 %v653
        %785 = vmatpush.msra.mxu0 %v650
        %786 = vmatpush.msra.mxu0 %v647
        %787 = vmatpush.msra.mxu0 %v644
        %788 = vmatpush.msra.mxu0 %v641
        %789 = vmatpush.msra.mxu0 %v638
        %790 = vmatpush.msra.mxu0 %v635
        %791 = vmatpush.msra.mxu0 %v632
        %792 = vmatpush.msra.mxu0 %v629
        %793 = vmatpush.msra.mxu0 %v626
        %794 = vmatpush.msra.mxu0 %v623
        %795 = vmatpush.msra.mxu0 %v620
        %796 = vmatpush.msra.mxu0 %v617
        %797 = vmatmul.f32.gmra.mxu0 %v749
        %v798 = vpop.f32.mrf.mxu0
        %v799 = vadd.f32 0.0, %v798
        %800 = vmatmul.f32.gmra.mxu0 %v750
        %v801 = vpop.f32.mrf.mxu0
        %v802 = vadd.f32 0.0, %v801
        %803 = vmatmul.f32.gmra.mxu0 %v751
        %v804 = vpop.f32.mrf.mxu0
        %v805 = vadd.f32 0.0, %v804
        %806 = vmatmul.f32.gmra.mxu0 %v752
        %v807 = vpop.f32.mrf.mxu0
        %v808 = vadd.f32 0.0, %v807
        %809 = vmatmul.f32.gmra.mxu0 %v753
        %v810 = vpop.f32.mrf.mxu0
        %v811 = vadd.f32 0.0, %v810
        %812 = vmatmul.f32.gmra.mxu0 %v754
        %v813 = vpop.f32.mrf.mxu0
        %v814 = vadd.f32 0.0, %v813
        %815 = vmatmul.f32.gmra.mxu0 %v755
        %v816 = vpop.f32.mrf.mxu0
        %v817 = vadd.f32 0.0, %v816
        %818 = vmatmul.f32.gmra.mxu0 %v756
        %v819 = vpop.f32.mrf.mxu0
        %v820 = vadd.f32 0.0, %v819
        %821 = vmatmul.f32.gmra.mxu0 %v757
        %v822 = vpop.f32.mrf.mxu0
        %v823 = vadd.f32 0.0, %v822
        %824 = vmatmul.f32.gmra.mxu0 %v758
        %v825 = vpop.f32.mrf.mxu0
        %v826 = vadd.f32 0.0, %v825
        %827 = vmatmul.f32.gmra.mxu0 %v759
        %v828 = vpop.f32.mrf.mxu0
        %v829 = vadd.f32 0.0, %v828
        %830 = vmatmul.f32.gmra.mxu0 %v760
        %v831 = vpop.f32.mrf.mxu0
        %v832 = vadd.f32 0.0, %v831
        %833 = vmatmul.f32.gmra.mxu0 %v761
        %v834 = vpop.f32.mrf.mxu0
        %v835 = vadd.f32 0.0, %v834
        %836 = vmatmul.f32.gmra.mxu0 %v762
        %v837 = vpop.f32.mrf.mxu0
        %v838 = vadd.f32 0.0, %v837
        %839 = vmatmul.f32.gmra.mxu0 %v763
        %v840 = vpop.f32.mrf.mxu0
        %v841 = vadd.f32 0.0, %v840
        %842 = vmatmul.f32.gmra.mxu0 %v764
        %v843 = vpop.f32.mrf.mxu0
        %v844 = vadd.f32 0.0, %v843
        %845 = vdwg.mxu0
        %v846 = vld [vmem:[#allocation2] sm:$0xff]
        %v847 = vld [vmem:[#allocation2 + $0x8] sm:$0xff]
        %v848 = vld [vmem:[#allocation2 + $0x10] sm:$0xff]
        %v849 = vld [vmem:[#allocation2 + $0x18] sm:$0xff]
        %v850 = vld [vmem:[#allocation2 + $0x20] sm:$0xff]
        %v851 = vld [vmem:[#allocation2 + $0x28] sm:$0xff]
        %v852 = vld [vmem:[#allocation2 + $0x30] sm:$0xff]
        %v853 = vld [vmem:[#allocation2 + $0x38] sm:$0xff]
        %v854 = vld [vmem:[#allocation2 + $0x40] sm:$0xff]
        %v855 = vld [vmem:[#allocation2 + $0x48] sm:$0xff]
        %v856 = vld [vmem:[#allocation2 + $0x50] sm:$0xff]
        %v857 = vld [vmem:[#allocation2 + $0x58] sm:$0xff]
        %v858 = vld [vmem:[#allocation2 + $0x60] sm:$0xff]
        %v859 = vld [vmem:[#allocation2 + $0x68] sm:$0xff]
        %v860 = vld [vmem:[#allocation2 + $0x70] sm:$0xff]
        %v861 = vld [vmem:[#allocation2 + $0x78] sm:$0xff]
        %v862 = vld [vmem:[#allocation2 + $0x80] sm:$0xff]
        %v863 = vld [vmem:[#allocation2 + $0x88] sm:$0xff]
        %v864 = vld [vmem:[#allocation2 + $0x90] sm:$0xff]
        %v865 = vld [vmem:[#allocation2 + $0x98] sm:$0xff]
        %v866 = vld [vmem:[#allocation2 + $0xa0] sm:$0xff]
        %v867 = vld [vmem:[#allocation2 + $0xa8] sm:$0xff]
        %v868 = vld [vmem:[#allocation2 + $0xb0] sm:$0xff]
        %v869 = vld [vmem:[#allocation2 + $0xb8] sm:$0xff]
        %v870 = vld [vmem:[#allocation2 + $0xc0] sm:$0xff]
        %v871 = vld [vmem:[#allocation2 + $0xc8] sm:$0xff]
        %v872 = vld [vmem:[#allocation2 + $0xd0] sm:$0xff]
        %v873 = vld [vmem:[#allocation2 + $0xd8] sm:$0xff]
        %v874 = vld [vmem:[#allocation2 + $0xe0] sm:$0xff]
        %v875 = vld [vmem:[#allocation2 + $0xe8] sm:$0xff]
        %v876 = vld [vmem:[#allocation2 + $0xf0] sm:$0xff]
        %v877 = vld [vmem:[#allocation2 + $0xf8] sm:$0xff]
        %v878 = vld [vmem:[%s326] sm:$0xff]
        %v879 = vld [vmem:[%s326 + $0x8] sm:$0xff]
        %v880 = vld [vmem:[%s326 + $0x10] sm:$0xff]
        %v881 = vld [vmem:[%s326 + $0x18] sm:$0xff]
        %v882 = vld [vmem:[%s326 + $0x20] sm:$0xff]
        %v883 = vld [vmem:[%s326 + $0x28] sm:$0xff]
        %v884 = vld [vmem:[%s326 + $0x30] sm:$0xff]
        %v885 = vld [vmem:[%s326 + $0x38] sm:$0xff]
        %v886 = vld [vmem:[%s326 + $0x40] sm:$0xff]
        %v887 = vld [vmem:[%s326 + $0x48] sm:$0xff]
        %v888 = vld [vmem:[%s326 + $0x50] sm:$0xff]
        %v889 = vld [vmem:[%s326 + $0x58] sm:$0xff]
        %v890 = vld [vmem:[%s326 + $0x60] sm:$0xff]
        %v891 = vld [vmem:[%s326 + $0x68] sm:$0xff]
        %v892 = vld [vmem:[%s326 + $0x70] sm:$0xff]
        %v893 = vld [vmem:[%s326 + $0x78] sm:$0xff]
        %v894 = vld [vmem:[%s326 + $0x80] sm:$0xff]
        %v895 = vld [vmem:[%s326 + $0x88] sm:$0xff]
        %v896 = vld [vmem:[%s326 + $0x90] sm:$0xff]
        %v897 = vld [vmem:[%s326 + $0x98] sm:$0xff]
        %v898 = vld [vmem:[%s326 + $0xa0] sm:$0xff]
        %v899 = vld [vmem:[%s326 + $0xa8] sm:$0xff]
        %v900 = vld [vmem:[%s326 + $0xb0] sm:$0xff]
        %v901 = vld [vmem:[%s326 + $0xb8] sm:$0xff]
        %v902 = vld [vmem:[%s326 + $0xc0] sm:$0xff]
        %v903 = vld [vmem:[%s326 + $0xc8] sm:$0xff]
        %v904 = vld [vmem:[%s326 + $0xd0] sm:$0xff]
        %v905 = vld [vmem:[%s326 + $0xd8] sm:$0xff]
        %v906 = vld [vmem:[%s326 + $0xe0] sm:$0xff]
        %v907 = vld [vmem:[%s326 + $0xe8] sm:$0xff]
        %v908 = vld [vmem:[%s326 + $0xf0] sm:$0xff]
        %v909 = vld [vmem:[%s326 + $0xf8] sm:$0xff]
        %910 = vmatpush.msra.mxu0 %v908
        %911 = vmatpush.msra.mxu0 %v906
        %912 = vmatpush.msra.mxu0 %v904
        %913 = vmatpush.msra.mxu0 %v902
        %914 = vmatpush.msra.mxu0 %v900
        %915 = vmatpush.msra.mxu0 %v898
        %916 = vmatpush.msra.mxu0 %v896
        %917 = vmatpush.msra.mxu0 %v894
        %918 = vmatpush.msra.mxu0 %v892
        %919 = vmatpush.msra.mxu0 %v890
        %920 = vmatpush.msra.mxu0 %v888
        %921 = vmatpush.msra.mxu0 %v886
        %922 = vmatpush.msra.mxu0 %v884
        %923 = vmatpush.msra.mxu0 %v882
        %924 = vmatpush.msra.mxu0 %v880
        %925 = vmatpush.msra.mxu0 %v878
        %926 = vmatmul.f32.gmra.mxu0 %v799
        %v927 = vpop.f32.mrf.mxu0
        %v928 = vadd.f32 0.0, %v927
        %929 = vmatmul.f32.gmra.mxu0 %v802
        %v930 = vpop.f32.mrf.mxu0
        %v931 = vadd.f32 0.0, %v930
        %932 = vmatmul.f32.gmra.mxu0 %v805
        %v933 = vpop.f32.mrf.mxu0
        %v934 = vadd.f32 0.0, %v933
        %935 = vmatmul.f32.gmra.mxu0 %v808
        %v936 = vpop.f32.mrf.mxu0
        %v937 = vadd.f32 0.0, %v936
        %938 = vmatmul.f32.gmra.mxu0 %v811
        %v939 = vpop.f32.mrf.mxu0
        %v940 = vadd.f32 0.0, %v939
        %941 = vmatmul.f32.gmra.mxu0 %v814
        %v942 = vpop.f32.mrf.mxu0
        %v943 = vadd.f32 0.0, %v942
        %944 = vmatmul.f32.gmra.mxu0 %v817
        %v945 = vpop.f32.mrf.mxu0
        %v946 = vadd.f32 0.0, %v945
        %947 = vmatmul.f32.gmra.mxu0 %v820
        %v948 = vpop.f32.mrf.mxu0
        %v949 = vadd.f32 0.0, %v948
        %950 = vmatmul.f32.gmra.mxu0 %v823
        %v951 = vpop.f32.mrf.mxu0
        %v952 = vadd.f32 0.0, %v951
        %953 = vmatmul.f32.gmra.mxu0 %v826
        %v954 = vpop.f32.mrf.mxu0
        %v955 = vadd.f32 0.0, %v954
        %956 = vmatmul.f32.gmra.mxu0 %v829
        %v957 = vpop.f32.mrf.mxu0
        %v958 = vadd.f32 0.0, %v957
        %959 = vmatmul.f32.gmra.mxu0 %v832
        %v960 = vpop.f32.mrf.mxu0
        %v961 = vadd.f32 0.0, %v960
        %962 = vmatmul.f32.gmra.mxu0 %v835
        %v963 = vpop.f32.mrf.mxu0
        %v964 = vadd.f32 0.0, %v963
        %965 = vmatmul.f32.gmra.mxu0 %v838
        %v966 = vpop.f32.mrf.mxu0
        %v967 = vadd.f32 0.0, %v966
        %968 = vmatmul.f32.gmra.mxu0 %v841
        %v969 = vpop.f32.mrf.mxu0
        %v970 = vadd.f32 0.0, %v969
        %971 = vmatmul.f32.gmra.mxu0 %v844
        %v972 = vpop.f32.mrf.mxu0
        %v973 = vadd.f32 0.0, %v972
        %974 = vdwg.mxu0
        %975 = vmatpush.msra.mxu0 %v909
        %976 = vmatpush.msra.mxu0 %v907
        %977 = vmatpush.msra.mxu0 %v905
        %978 = vmatpush.msra.mxu0 %v903
        %979 = vmatpush.msra.mxu0 %v901
        %980 = vmatpush.msra.mxu0 %v899
        %981 = vmatpush.msra.mxu0 %v897
        %982 = vmatpush.msra.mxu0 %v895
        %983 = vmatpush.msra.mxu0 %v893
        %984 = vmatpush.msra.mxu0 %v891
        %985 = vmatpush.msra.mxu0 %v889
        %986 = vmatpush.msra.mxu0 %v887
        %987 = vmatpush.msra.mxu0 %v885
        %988 = vmatpush.msra.mxu0 %v883
        %989 = vmatpush.msra.mxu0 %v881
        %990 = vmatpush.msra.mxu0 %v879
        %991 = vmatmul.f32.gmra.mxu0 %v799
        %v992 = vpop.f32.mrf.mxu0
        %v993 = vadd.f32 0.0, %v992
        %994 = vmatmul.f32.gmra.mxu0 %v802
        %v995 = vpop.f32.mrf.mxu0
        %v996 = vadd.f32 0.0, %v995
        %997 = vmatmul.f32.gmra.mxu0 %v805
        %v998 = vpop.f32.mrf.mxu0
        %v999 = vadd.f32 0.0, %v998
        %1000 = vmatmul.f32.gmra.mxu0 %v808
        %v1001 = vpop.f32.mrf.mxu0
        %v1002 = vadd.f32 0.0, %v1001
        %1003 = vmatmul.f32.gmra.mxu0 %v811
        %v1004 = vpop.f32.mrf.mxu0
        %v1005 = vadd.f32 0.0, %v1004
        %1006 = vmatmul.f32.gmra.mxu0 %v814
        %v1007 = vpop.f32.mrf.mxu0
        %v1008 = vadd.f32 0.0, %v1007
        %1009 = vmatmul.f32.gmra.mxu0 %v817
        %v1010 = vpop.f32.mrf.mxu0
        %v1011 = vadd.f32 0.0, %v1010
        %1012 = vmatmul.f32.gmra.mxu0 %v820
        %v1013 = vpop.f32.mrf.mxu0
        %v1014 = vadd.f32 0.0, %v1013
        %1015 = vmatmul.f32.gmra.mxu0 %v823
        %v1016 = vpop.f32.mrf.mxu0
        %v1017 = vadd.f32 0.0, %v1016
        %1018 = vmatmul.f32.gmra.mxu0 %v826
        %v1019 = vpop.f32.mrf.mxu0
        %v1020 = vadd.f32 0.0, %v1019
        %1021 = vmatmul.f32.gmra.mxu0 %v829
        %v1022 = vpop.f32.mrf.mxu0
        %v1023 = vadd.f32 0.0, %v1022
        %1024 = vmatmul.f32.gmra.mxu0 %v832
        %v1025 = vpop.f32.mrf.mxu0
        %v1026 = vadd.f32 0.0, %v1025
        %1027 = vmatmul.f32.gmra.mxu0 %v835
        %v1028 = vpop.f32.mrf.mxu0
        %v1029 = vadd.f32 0.0, %v1028
        %1030 = vmatmul.f32.gmra.mxu0 %v838
        %v1031 = vpop.f32.mrf.mxu0
        %v1032 = vadd.f32 0.0, %v1031
        %1033 = vmatmul.f32.gmra.mxu0 %v841
        %v1034 = vpop.f32.mrf.mxu0
        %v1035 = vadd.f32 0.0, %v1034
        %1036 = vmatmul.f32.gmra.mxu0 %v844
        %v1037 = vpop.f32.mrf.mxu0
        %v1038 = vadd.f32 0.0, %v1037
        %1039 = vdwg.mxu0
        %v1040 = vadd.f32 %v846, %v928
        %v1041 = vadd.f32 %v847, %v993
        %v1042 = vadd.f32 %v848, %v931
        %v1043 = vadd.f32 %v849, %v996
        %v1044 = vadd.f32 %v850, %v934
        %v1045 = vadd.f32 %v851, %v999
        %v1046 = vadd.f32 %v852, %v937
        %v1047 = vadd.f32 %v853, %v1002
        %v1048 = vadd.f32 %v854, %v940
        %v1049 = vadd.f32 %v855, %v1005
        %v1050 = vadd.f32 %v856, %v943
        %v1051 = vadd.f32 %v857, %v1008
        %v1052 = vadd.f32 %v858, %v946
        %v1053 = vadd.f32 %v859, %v1011
        %v1054 = vadd.f32 %v860, %v949
        %v1055 = vadd.f32 %v861, %v1014
        %v1056 = vadd.f32 %v862, %v952
        %v1057 = vadd.f32 %v863, %v1017
        %v1058 = vadd.f32 %v864, %v955
        %v1059 = vadd.f32 %v865, %v1020
        %v1060 = vadd.f32 %v866, %v958
        %v1061 = vadd.f32 %v867, %v1023
        %v1062 = vadd.f32 %v868, %v961
        %v1063 = vadd.f32 %v869, %v1026
        %v1064 = vadd.f32 %v870, %v964
        %v1065 = vadd.f32 %v871, %v1029
        %v1066 = vadd.f32 %v872, %v967
        %v1067 = vadd.f32 %v873, %v1032
        %v1068 = vadd.f32 %v874, %v970
        %v1069 = vadd.f32 %v875, %v1035
        %v1070 = vadd.f32 %v876, %v973
        %v1071 = vadd.f32 %v877, %v1038
        %1072 = vst [vmem:[#allocation2] sm:$0xff] %v1040
        %1073 = vst [vmem:[#allocation2 + $0x8] sm:$0xff] %v1041
        %1074 = vst [vmem:[#allocation2 + $0x10] sm:$0xff] %v1042
        %1075 = vst [vmem:[#allocation2 + $0x18] sm:$0xff] %v1043
        %1076 = vst [vmem:[#allocation2 + $0x20] sm:$0xff] %v1044
        %1077 = vst [vmem:[#allocation2 + $0x28] sm:$0xff] %v1045
        %1078 = vst [vmem:[#allocation2 + $0x30] sm:$0xff] %v1046
        %1079 = vst [vmem:[#allocation2 + $0x38] sm:$0xff] %v1047
        %1080 = vst [vmem:[#allocation2 + $0x40] sm:$0xff] %v1048
        %1081 = vst [vmem:[#allocation2 + $0x48] sm:$0xff] %v1049
        %1082 = vst [vmem:[#allocation2 + $0x50] sm:$0xff] %v1050
        %1083 = vst [vmem:[#allocation2 + $0x58] sm:$0xff] %v1051
        %1084 = vst [vmem:[#allocation2 + $0x60] sm:$0xff] %v1052
        %1085 = vst [vmem:[#allocation2 + $0x68] sm:$0xff] %v1053
        %1086 = vst [vmem:[#allocation2 + $0x70] sm:$0xff] %v1054
        %1087 = vst [vmem:[#allocation2 + $0x78] sm:$0xff] %v1055
        %1088 = vst [vmem:[#allocation2 + $0x80] sm:$0xff] %v1056
        %1089 = vst [vmem:[#allocation2 + $0x88] sm:$0xff] %v1057
        %1090 = vst [vmem:[#allocation2 + $0x90] sm:$0xff] %v1058
        %1091 = vst [vmem:[#allocation2 + $0x98] sm:$0xff] %v1059
        %1092 = vst [vmem:[#allocation2 + $0xa0] sm:$0xff] %v1060
        %1093 = vst [vmem:[#allocation2 + $0xa8] sm:$0xff] %v1061
        %1094 = vst [vmem:[#allocation2 + $0xb0] sm:$0xff] %v1062
        %1095 = vst [vmem:[#allocation2 + $0xb8] sm:$0xff] %v1063
        %1096 = vst [vmem:[#allocation2 + $0xc0] sm:$0xff] %v1064
        %1097 = vst [vmem:[#allocation2 + $0xc8] sm:$0xff] %v1065
        %1098 = vst [vmem:[#allocation2 + $0xd0] sm:$0xff] %v1066
        %1099 = vst [vmem:[#allocation2 + $0xd8] sm:$0xff] %v1067
        %1100 = vst [vmem:[#allocation2 + $0xe0] sm:$0xff] %v1068
        %1101 = vst [vmem:[#allocation2 + $0xe8] sm:$0xff] %v1069
        %1102 = vst [vmem:[#allocation2 + $0xf0] sm:$0xff] %v1070
        %1103 = vst [vmem:[#allocation2 + $0xf8] sm:$0xff] %v1071
        %p1104 = scmp.eq.s32.totalorder %s37, 1
        // Predicated region
        $region57: #{tpu_custom_call.1} parent=35 // pred_check
          %p1105 = pneg %p1104
        $region58: #{tpu_custom_call.1} parent=35 // pred_check_branch
          %1107 = sbr.rel (%p1105) target = $region60
        $region59: #{tpu_custom_call.1} parent=35 // pred_region
          %v1108 = vld [vmem:[#allocation2] sm:$0xff]
          %v1109 = vld [vmem:[#allocation2 + $0x8] sm:$0xff]
          %v1110 = vld [vmem:[#allocation2 + $0x10] sm:$0xff]
          %v1111 = vld [vmem:[#allocation2 + $0x18] sm:$0xff]
          %v1112 = vld [vmem:[#allocation2 + $0x20] sm:$0xff]
          %v1113 = vld [vmem:[#allocation2 + $0x28] sm:$0xff]
          %v1114 = vld [vmem:[#allocation2 + $0x30] sm:$0xff]
          %v1115 = vld [vmem:[#allocation2 + $0x38] sm:$0xff]
          %v1116 = vld [vmem:[#allocation2 + $0x40] sm:$0xff]
          %v1117 = vld [vmem:[#allocation2 + $0x48] sm:$0xff]
          %v1118 = vld [vmem:[#allocation2 + $0x50] sm:$0xff]
          %v1119 = vld [vmem:[#allocation2 + $0x58] sm:$0xff]
          %v1120 = vld [vmem:[#allocation2 + $0x60] sm:$0xff]
          %v1121 = vld [vmem:[#allocation2 + $0x68] sm:$0xff]
          %v1122 = vld [vmem:[#allocation2 + $0x70] sm:$0xff]
          %v1123 = vld [vmem:[#allocation2 + $0x78] sm:$0xff]
          %v1124 = vld [vmem:[#allocation2 + $0x80] sm:$0xff]
          %v1125 = vld [vmem:[#allocation2 + $0x88] sm:$0xff]
          %v1126 = vld [vmem:[#allocation2 + $0x90] sm:$0xff]
          %v1127 = vld [vmem:[#allocation2 + $0x98] sm:$0xff]
          %v1128 = vld [vmem:[#allocation2 + $0xa0] sm:$0xff]
          %v1129 = vld [vmem:[#allocation2 + $0xa8] sm:$0xff]
          %v1130 = vld [vmem:[#allocation2 + $0xb0] sm:$0xff]
          %v1131 = vld [vmem:[#allocation2 + $0xb8] sm:$0xff]
          %v1132 = vld [vmem:[#allocation2 + $0xc0] sm:$0xff]
          %v1133 = vld [vmem:[#allocation2 + $0xc8] sm:$0xff]
          %v1134 = vld [vmem:[#allocation2 + $0xd0] sm:$0xff]
          %v1135 = vld [vmem:[#allocation2 + $0xd8] sm:$0xff]
          %v1136 = vld [vmem:[#allocation2 + $0xe0] sm:$0xff]
          %v1137 = vld [vmem:[#allocation2 + $0xe8] sm:$0xff]
          %v1138 = vld [vmem:[#allocation2 + $0xf0] sm:$0xff]
          %v1139 = vld [vmem:[#allocation2 + $0xf8] sm:$0xff]
          %1140 = vst [vmem:[%s360] sm:$0xff] %v1108
          %1141 = vst [vmem:[%s360 + $0x8] sm:$0xff] %v1109
          %1142 = vst [vmem:[%s360 + $0x10] sm:$0xff] %v1110
          %1143 = vst [vmem:[%s360 + $0x18] sm:$0xff] %v1111
          %1144 = vst [vmem:[%s360 + $0x20] sm:$0xff] %v1112
          %1145 = vst [vmem:[%s360 + $0x28] sm:$0xff] %v1113
          %1146 = vst [vmem:[%s360 + $0x30] sm:$0xff] %v1114
          %1147 = vst [vmem:[%s360 + $0x38] sm:$0xff] %v1115
          %1148 = vst [vmem:[%s360 + $0x40] sm:$0xff] %v1116
          %1149 = vst [vmem:[%s360 + $0x48] sm:$0xff] %v1117
          %1150 = vst [vmem:[%s360 + $0x50] sm:$0xff] %v1118
          %1151 = vst [vmem:[%s360 + $0x58] sm:$0xff] %v1119
          %1152 = vst [vmem:[%s360 + $0x60] sm:$0xff] %v1120
          %1153 = vst [vmem:[%s360 + $0x68] sm:$0xff] %v1121
          %1154 = vst [vmem:[%s360 + $0x70] sm:$0xff] %v1122
          %1155 = vst [vmem:[%s360 + $0x78] sm:$0xff] %v1123
          %1156 = vst [vmem:[%s360 + $0x80] sm:$0xff] %v1124
          %1157 = vst [vmem:[%s360 + $0x88] sm:$0xff] %v1125
          %1158 = vst [vmem:[%s360 + $0x90] sm:$0xff] %v1126
          %1159 = vst [vmem:[%s360 + $0x98] sm:$0xff] %v1127
          %1160 = vst [vmem:[%s360 + $0xa0] sm:$0xff] %v1128
          %1161 = vst [vmem:[%s360 + $0xa8] sm:$0xff] %v1129
          %1162 = vst [vmem:[%s360 + $0xb0] sm:$0xff] %v1130
          %1163 = vst [vmem:[%s360 + $0xb8] sm:$0xff] %v1131
          %1164 = vst [vmem:[%s360 + $0xc0] sm:$0xff] %v1132
          %1165 = vst [vmem:[%s360 + $0xc8] sm:$0xff] %v1133
          %1166 = vst [vmem:[%s360 + $0xd0] sm:$0xff] %v1134
          %1167 = vst [vmem:[%s360 + $0xd8] sm:$0xff] %v1135
          %1168 = vst [vmem:[%s360 + $0xe0] sm:$0xff] %v1136
          %1169 = vst [vmem:[%s360 + $0xe8] sm:$0xff] %v1137
          %1170 = vst [vmem:[%s360 + $0xf0] sm:$0xff] %v1138
          %1171 = vst [vmem:[%s360 + $0xf8] sm:$0xff] %v1139
        $region60: #{tpu_custom_call.1} parent=35 // pred_fallthru
          _
        %s1172 = sand.u32 %s153, 1
        %s1173 = scalar_lea.sflag [#allocation5], %s1172
        %s1174 = sand.u32 %s153, 1
        %s1175 = smul.addr %s1174, 256
        %s1176 = scalar_lea.vmem [#allocation11], %s1175
        %s1177 = sand.u32 %s181, 1
        %s1178 = scalar_lea.sflag [#allocation13], %s1177
        %s1179 = sand.u32 %s181, 1
        %s1180 = smul.addr %s1179, 128
        %s1181 = scalar_lea.vmem [#allocation12], %s1180
        // Predicated region
        $region61: #{tpu_custom_call.1} parent=35 // pred_check
          %p1182 = pneg %p163
        $region62: #{tpu_custom_call.1} parent=35 // pred_check_branch
          %1184 = sbr.rel (%p1182) target = $region64
        $region63: #{tpu_custom_call.1} parent=35 // pred_region
          %1186 = vsyncadd %s1173, 0
          %s1187 = smul.addr %s36, 32
          %s1188 = smul.addr %s1187, 8
          %s1189 = scalar_lea.hbm %s4, %s1188
          %s1190 = sshll.u32 %s1176, 4
          %s1191 = int_to_ptr.vmem [resolvable:$true] %s1190
          %s1192 = sshll.u32 %s1189, 4
          %s1193 = int_to_ptr.hbm [resolvable:$true] %s1192
          %1198 = dma.vmem_to_hbm [thread:$0]  %s1191, 4096, %s1193, %s1173, 256, 256, 16
        $region64: #{tpu_custom_call.1} parent=35 // pred_fallthru
          _
        // Predicated region
        $region65: #{tpu_custom_call.1} parent=35 // pred_check
          %p1199 = pneg %p191
        $region66: #{tpu_custom_call.1} parent=35 // pred_check_branch
          %1201 = sbr.rel (%p1199) target = $region68
        $region67: #{tpu_custom_call.1} parent=35 // pred_region
          %1203 = vsyncadd %s1178, 0
          %s1204 = smul.addr %s37, 16
          %s1205 = smul.addr %s36, 32
          %s1206 = sadd.s32 %s1204, %s1205
          %s1207 = smul.addr %s1206, 8
          %s1208 = scalar_lea.hbm %s5, %s1207
          %s1209 = sshll.u32 %s1181, 4
          %s1210 = int_to_ptr.vmem [resolvable:$true] %s1209
          %s1211 = sshll.u32 %s1208, 4
          %s1212 = int_to_ptr.hbm [resolvable:$true] %s1211
          %1217 = dma.vmem_to_hbm [thread:$0]  %s1210, 2048, %s1212, %s1178, 128, 128, 8
        $region68: #{tpu_custom_call.1} parent=35 // pred_fallthru
          _
      $region36: #{tpu_custom_call.1} parent=5 // pred_fallthru
        _
      %p1218 = scmp.le.s32.totalorder 2, %s27
      // Predicated region
      $region69: #{tpu_custom_call.1} parent=5 // pred_check
        %p1219 = pneg %p1218
      $region70: #{tpu_custom_call.1} parent=5 // pred_check_branch
        %1221 = sbr.rel (%p1219) target = $region72
      $region71: #{tpu_custom_call.1} parent=5 // pred_region
        %s1222 = ssub.s32 %s27, 2
        // Predicated region
        $region73: #{tpu_custom_call.1} parent=71 // pred_check
          %p1223 = pneg %p169
        $region74: #{tpu_custom_call.1} parent=71 // pred_check_branch
          %1225 = sbr.rel (%p1223) target = $region76
        $region75: #{tpu_custom_call.1} parent=71 // pred_region
          %s1226 = sand.u32 %s154, 1
          %s1227 = scalar_lea.sflag [#allocation5], %s1226
          %s1228 = sand.u32 %s154, 1
          %s1229 = smul.addr %s1228, 256
          %s1230 = scalar_lea.vmem [#allocation11], %s1229
          %1232 = dma.done %s1227, 4096
        $region76: #{tpu_custom_call.1} parent=71 // pred_fallthru
          _
        // Predicated region
        $region77: #{tpu_custom_call.1} parent=71 // pred_check
          %p1233 = pneg %p197
        $region78: #{tpu_custom_call.1} parent=71 // pred_check_branch
          %1235 = sbr.rel (%p1233) target = $region80
        $region79: #{tpu_custom_call.1} parent=71 // pred_region
          %s1236 = sand.u32 %s182, 1
          %s1237 = scalar_lea.sflag [#allocation13], %s1236
          %s1238 = sand.u32 %s182, 1
          %s1239 = smul.addr %s1238, 128
          %s1240 = scalar_lea.vmem [#allocation12], %s1239
          %1242 = dma.done %s1237, 2048
        $region80: #{tpu_custom_call.1} parent=71 // pred_fallthru
          _
      $region72: #{tpu_custom_call.1} parent=5 // pred_fallthru
        _
    $region6: #{tpu_custom_call.1} parent=1 // loop_footer
      %s31 = sadd.s32 1, %s27
    $region7: #{tpu_custom_call.1} parent=1 // loop_footer_branch
      %26 = sbr.rel target = $region3
    $region8: #{tpu_custom_call.1} parent=1 // loop_exit
      _
    %1243 = vsyncpa [#allocation4], 1
    %s1244 = scalar_lea.sflag [#allocation4], 1
    %1245 = vsyncpa %s1244, 1
    %1246 = vsyncpa [#allocation7], 1
    %s1247 = scalar_lea.sflag [#allocation7], 1
    %1248 = vsyncpa %s1247, 1
    %1249 = vsyncpa [#allocation10], 1
    %s1250 = scalar_lea.sflag [#allocation10], 1
    %1251 = vsyncpa %s1250, 1
    %1252 = vsyncpa [#allocation5], 1
    %s1253 = scalar_lea.sflag [#allocation5], 1
    %1254 = vsyncpa %s1253, 1
    %1255 = vsyncpa [#allocation13], 1
    %s1256 = scalar_lea.sflag [#allocation13], 1
    %1257 = vsyncpa %s1256, 1

</llo_original>
